<compile_context>
chip_gen: v5e
topology: v5e:2x2
jax: 0.10.0
libtpu: 0.0.40
codegen_flags: <defaults>
</compile_context>

<pallas_src>
import functools

import jax
import jax.numpy as jnp
from jax.experimental import pallas as pl
from jax.experimental.pallas import tpu as pltpu

LN_EPS = 1e-5  # PyTorch nn.LayerNorm default


def _cast(x, dtype):
    return x if dtype is None else x.astype(dtype)


def _layernorm_full(y, w, b):
    # LayerNorm with normalized_shape=(to_len, to_dim): mean/var over BOTH dims.
    mean = jnp.mean(y)
    var = jnp.mean((y - mean) ** 2)
    return (y - mean) * jax.lax.rsqrt(var + LN_EPS) * w + b


def _mha_core(x_res, q, k, v, wo_heads, bo, lnw, lnb, *, num_heads, mxu_dtype):
    """Multi-head attention core + output proj + residual + full-slab LayerNorm.

    q: (T, L); k, v: (F, L); wo_heads: (H, d, to_dim).
    Heads are a single batched contraction per step (leading batch dim), so
    there is no per-head matmul loop, no explicit k.T and no lane-dim concat.
    """
    L = q.shape[-1]
    d = L // num_heads
    inv_d = 1.0 / d  # reference divides scores by d_tensor (NOT sqrt(d))

    # Head-major (H, T/F, d): static lane slices stacked along a new major dim.
    qh = jnp.stack([q[:, h * d:(h + 1) * d] for h in range(num_heads)], axis=0) * inv_d
    kh = jnp.stack([k[:, h * d:(h + 1) * d] for h in range(num_heads)], axis=0)
    vh = jnp.stack([v[:, h * d:(h + 1) * d] for h in range(num_heads)], axis=0)

    # Scores: one batched dot_general over heads, contracting d directly.
    s = jnp.einsum("htd,hfd->htf", _cast(qh, mxu_dtype), _cast(kh, mxu_dtype),
                   preferred_element_type=jnp.float32)
    s = s - jnp.max(s, axis=-1, keepdims=True)
    e = jnp.exp(s)
    p = e * pl.reciprocal(jnp.sum(e, axis=-1, keepdims=True), approx=True)

    ctx = jnp.einsum("htf,hfd->htd", _cast(p, mxu_dtype), _cast(vh, mxu_dtype),
                     preferred_element_type=jnp.float32)
    # Output projection per head, then reduce over the (cheap) major head axis
    # instead of concatenating heads along lanes.
    proj = jnp.sum(
        jnp.einsum("htd,hdo->hto", _cast(ctx, mxu_dtype), _cast(wo_heads, mxu_dtype),
                   preferred_element_type=jnp.float32),
        axis=0) + bo
    return _layernorm_full(x_res + proj, lnw, lnb)


# -----------------------------------------------------------------------------
# Fully fused decoder-block kernel: one grid step per batch element.
# -----------------------------------------------------------------------------
def decoder_block_kernel(
        x_to_ref, x_from_ref,
        # cross-attention
        c_wq_ref, c_bq_ref, c_wkv_ref, c_bkv_ref, c_woh_ref, c_bo_ref, c_lnw_ref, c_lnb_ref,
        # self-attention
        s_wqkv_ref, s_bqkv_ref, s_woh_ref, s_bo_ref, s_lnw_ref, s_lnb_ref,
        # FFN + final skip LayerNorm
        f_w1_ref, f_b1_ref, f_w2_ref, f_b2_ref, f_lnw_ref, f_lnb_ref,
        out_ref, *, num_heads, mxu_dtype):
    x_to = x_to_ref[0]      # (T, to_dim)
    x_from = x_from_ref[0]  # (F, from_dim)
    L = c_wq_ref.shape[1]   # latent_dim

    # ---- stage 1: cross-attention (Q from x_to, fused K|V proj from x_from) --
    q = jnp.dot(_cast(x_to, mxu_dtype), _cast(c_wq_ref[...], mxu_dtype),
                preferred_element_type=jnp.float32) + c_bq_ref[...]
    kv = jnp.dot(_cast(x_from, mxu_dtype), _cast(c_wkv_ref[...], mxu_dtype),
                 preferred_element_type=jnp.float32) + c_bkv_ref[...]
    x1 = _mha_core(x_to, q, kv[:, :L], kv[:, L:],
                   c_woh_ref[...], c_bo_ref[...], c_lnw_ref[...], c_lnb_ref[...],
                   num_heads=num_heads, mxu_dtype=mxu_dtype)

    # ---- stage 2: self-attention (fused Q|K|V projection, VMEM-resident) ----
    qkv = jnp.dot(_cast(x1, mxu_dtype), _cast(s_wqkv_ref[...], mxu_dtype),
                  preferred_element_type=jnp.float32) + s_bqkv_ref[...]
    x2 = _mha_core(x1, qkv[:, :L], qkv[:, L:2 * L], qkv[:, 2 * L:],
                   s_woh_ref[...], s_bo_ref[...], s_lnw_ref[...], s_lnb_ref[...],
                   num_heads=num_heads, mxu_dtype=mxu_dtype)

    # ---- stage 3: FFN + skip LayerNorm ----
    h = jnp.dot(_cast(x2, mxu_dtype), _cast(f_w1_ref[...], mxu_dtype),
                preferred_element_type=jnp.float32) + f_b1_ref[...]
    h = jnp.maximum(h, 0.0)  # ReLU
    f = jnp.dot(_cast(h, mxu_dtype), _cast(f_w2_ref[...], mxu_dtype),
                preferred_element_type=jnp.float32) + f_b2_ref[...]
    # TODO(synk): nn.Dropout(0.2) is a no-op in eval mode; omitted here.
    out_ref[0] = _layernorm_full(f + x2, f_lnw_ref[...], f_lnb_ref[...]).astype(out_ref.dtype)


# -----------------------------------------------------------------------------
# Wrapper
# -----------------------------------------------------------------------------
def _rep_spec(arr):
    nd = arr.ndim
    return pl.BlockSpec(arr.shape, lambda b, _nd=nd: (0,) * _nd)


def decoder_transformer_block(x_to, x_from, params, num_heads, mxu_dtype=None):
    B, T, Dt = x_to.shape
    _, F, Df = x_from.shape
    ca, sa, ff = params["cross_attn"], params["self_attn"], params["ffn"]
    L = ca["wq"].shape[1]
    d = L // num_heads

    # Wrapper-side (free) weight repacking: fused K|V and Q|K|V projection
    # weights, and per-head-reshaped output-projection weights.
    c_wkv = jnp.concatenate([ca["wk"], ca["wv"]], axis=1)             # (Df, 2L)
    c_bkv = jnp.concatenate([ca["bk"], ca["bv"]], axis=1)             # (1, 2L)
    c_woh = ca["wo"].reshape(num_heads, d, Dt)                        # (H, d, Dt)
    s_wqkv = jnp.concatenate([sa["wq"], sa["wk"], sa["wv"]], axis=1)  # (Dt, 3L)
    s_bqkv = jnp.concatenate([sa["bq"], sa["bk"], sa["bv"]], axis=1)  # (1, 3L)
    s_woh = sa["wo"].reshape(num_heads, d, Dt)                        # (H, d, Dt)

    weights = [
        ca["wq"], ca["bq"], c_wkv, c_bkv, c_woh, ca["bo"], ca["lnw"], ca["lnb"],
        s_wqkv, s_bqkv, s_woh, sa["bo"], sa["lnw"], sa["lnb"],
        ff["w1"], ff["b1"], ff["w2"], ff["b2"], ff["lnw"], ff["lnb"],
    ]

    in_specs = [
        pl.BlockSpec((1, T, Dt), lambda b: (b, 0, 0)),
        pl.BlockSpec((1, F, Df), lambda b: (b, 0, 0)),
    ] + [_rep_spec(w) for w in weights]

    return pl.pallas_call(
        functools.partial(decoder_block_kernel, num_heads=num_heads, mxu_dtype=mxu_dtype),
        out_shape=jax.ShapeDtypeStruct((B, T, Dt), x_to.dtype),
        grid=(B,),
        in_specs=in_specs,
        out_specs=pl.BlockSpec((1, T, Dt), lambda b: (b, 0, 0)),
        compiler_params=pltpu.CompilerParams(dimension_semantics=("parallel",)),
    )(x_to, x_from, *weights)


# -----------------------------------------------------------------------------
# Deterministic parameter construction
# -----------------------------------------------------------------------------
def init_params(key, to_dim, to_len, from_dim, latent_dim):
    ks = iter(jax.random.split(key, 32))

    def lin(k, din, dout, scale=0.05):
        kw, kb = jax.random.split(k)
        return (scale * jax.random.normal(kw, (din, dout), jnp.float32),
                scale * jax.random.normal(kb, (1, dout), jnp.float32))

    def attn_params(from_d):
        wq, bq = lin(next(ks), to_dim, latent_dim)
        wk, bk = lin(next(ks), from_d, latent_dim)
        wv, bv = lin(next(ks), from_d, latent_dim)
        wo, bo = lin(next(ks), latent_dim, to_dim)
        lnw = 1.0 + 0.05 * jax.random.normal(next(ks), (to_len, to_dim), jnp.float32)
        lnb = 0.05 * jax.random.normal(next(ks), (to_len, to_dim), jnp.float32)
        return dict(wq=wq, bq=bq, wk=wk, bk=bk, wv=wv, bv=bv,
                    wo=wo, bo=bo, lnw=lnw, lnb=lnb)

    hidden = 4 * to_dim
    w1, b1 = lin(next(ks), to_dim, hidden)
    w2, b2 = lin(next(ks), hidden, to_dim)
    lnw = 1.0 + 0.05 * jax.random.normal(next(ks), (to_len, to_dim), jnp.float32)
    lnb = 0.05 * jax.random.normal(next(ks), (to_len, to_dim), jnp.float32)

    return {
        "cross_attn": attn_params(from_dim),
        "self_attn": attn_params(to_dim),
        "ffn": dict(w1=w1, b1=b1, w2=w2, b2=b2, lnw=lnw, lnb=lnb),
    }


# -----------------------------------------------------------------------------
# Pure-JAX reference (mirrors the PyTorch module) for a sanity check
# -----------------------------------------------------------------------------
def _ref_layernorm(y, w, b):
    mean = jnp.mean(y, axis=(1, 2), keepdims=True)
    var = jnp.mean((y - mean) ** 2, axis=(1, 2), keepdims=True)
    return (y - mean) * jax.lax.rsqrt(var + LN_EPS) * w + b


def _ref_attention_block(x_to, x_from, p, num_heads):
    q = x_to @ p["wq"] + p["bq"]
    k = x_from @ p["wk"] + p["bk"]
    v = x_from @ p["wv"] + p["bv"]
    B, T, L = q.shape
    F = k.shape[1]
    d = L // num_heads
    qh = q.reshape(B, T, num_heads, d).transpose(0, 2, 1, 3)
    kh = k.reshape(B, F, num_heads, d).transpose(0, 2, 1, 3)
    vh = v.reshape(B, F, num_heads, d).transpose(0, 2, 1, 3)
    s = qh @ kh.transpose(0, 1, 3, 2) / d
    a = jax.nn.softmax(s, axis=-1)
    ctx = (a @ vh).transpose(0, 2, 1, 3).reshape(B, T, L)
    out = ctx @ p["wo"] + p["bo"]
    return _ref_layernorm(x_to + out, p["lnw"], p["lnb"])


def _ref_decoder_block(x_to, x_from, params, num_heads):
    x1 = _ref_attention_block(x_to, x_from, params["cross_attn"], num_heads)
    x2 = _ref_attention_block(x1, x1, params["self_attn"], num_heads)
    ff = params["ffn"]
    h = jnp.maximum(x2 @ ff["w1"] + ff["b1"], 0.0)
    f = h @ ff["w2"] + ff["b2"]
    return _ref_layernorm(f + x2, ff["lnw"], ff["lnb"])


if __name__ == "__main__":
    # Small, module-consistent shapes.
    B = 2
    to_len, to_dim = 8, 32
    from_len, from_dim = 8, 16
    latent_dim, num_heads = 32, 4

    key = jax.random.PRNGKey(0)
    k_xto, k_xfrom, k_params = jax.random.split(key, 3)
    x_to = jax.random.normal(k_xto, (B, to_len, to_dim), jnp.float32)
    x_from = jax.random.normal(k_xfrom, (B, from_len, from_dim), jnp.float32)
    params = init_params(k_params, to_dim, to_len, from_dim, latent_dim)

    # Keep exact f32 semantics by default; pass mxu_dtype=jnp.bfloat16 for the
    # v6e/v7x bf16 MXU fast path.
    out = decoder_transformer_block(x_to, x_from, params, num_heads, mxu_dtype=None)
    jax.block_until_ready(out)
    assert out.shape == (B, to_len, to_dim)

    ref = _ref_decoder_block(x_to, x_from, params, num_heads)
    err = float(jnp.max(jnp.abs(out - ref)))
    # approx reciprocal in the softmax denominator gives ~1e-3-level deltas
    assert err < 5e-2, f"max abs error vs reference: {err}"
    print("KERNEL_OK")
</pallas_src>

<mosaic_0001>
module attributes {stable_mosaic.version = 11 : i64} {
  func.func @decoder_block_kernel(%arg0: i32, %arg1: memref<1x8x32xf32, #tpu.memory_space<vmem>>, %arg2: memref<1x8x16xf32, #tpu.memory_space<vmem>>, %arg3: memref<32x32xf32, #tpu.memory_space<vmem>>, %arg4: memref<1x32xf32, #tpu.memory_space<vmem>>, %arg5: memref<16x64xf32, #tpu.memory_space<vmem>>, %arg6: memref<1x64xf32, #tpu.memory_space<vmem>>, %arg7: memref<4x8x32xf32, #tpu.memory_space<vmem>>, %arg8: memref<1x32xf32, #tpu.memory_space<vmem>>, %arg9: memref<8x32xf32, #tpu.memory_space<vmem>>, %arg10: memref<8x32xf32, #tpu.memory_space<vmem>>, %arg11: memref<32x96xf32, #tpu.memory_space<vmem>>, %arg12: memref<1x96xf32, #tpu.memory_space<vmem>>, %arg13: memref<4x8x32xf32, #tpu.memory_space<vmem>>, %arg14: memref<1x32xf32, #tpu.memory_space<vmem>>, %arg15: memref<8x32xf32, #tpu.memory_space<vmem>>, %arg16: memref<8x32xf32, #tpu.memory_space<vmem>>, %arg17: memref<32x128xf32, #tpu.memory_space<vmem>>, %arg18: memref<1x128xf32, #tpu.memory_space<vmem>>, %arg19: memref<128x32xf32, #tpu.memory_space<vmem>>, %arg20: memref<1x32xf32, #tpu.memory_space<vmem>>, %arg21: memref<8x32xf32, #tpu.memory_space<vmem>>, %arg22: memref<8x32xf32, #tpu.memory_space<vmem>>, %arg23: memref<1x8x32xf32, #tpu.memory_space<vmem>>) attributes {dimension_semantics = [#tpu.dimension_semantics<parallel>], iteration_bounds = array<i64: 2>, scalar_prefetch = 0 : i64, scratch_operands = 0 : i64, tpu.core_type = #tpu.core_type<tc>, window_params = [{transform_indices = @transform_0, window_bounds = array<i64: 1, 8, 32>}, {transform_indices = @transform_1, window_bounds = array<i64: 1, 8, 16>}, {pipeline_mode = #tpu.pipeline_mode<synchronous>, transform_indices = @transform_2, window_bounds = array<i64: 32, 32>}, {pipeline_mode = #tpu.pipeline_mode<synchronous>, transform_indices = @transform_3, window_bounds = array<i64: 1, 32>}, {pipeline_mode = #tpu.pipeline_mode<synchronous>, transform_indices = @transform_4, window_bounds = array<i64: 16, 64>}, {pipeline_mode = #tpu.pipeline_mode<synchronous>, transform_indices = @transform_5, window_bounds = array<i64: 1, 64>}, {pipeline_mode = #tpu.pipeline_mode<synchronous>, transform_indices = @transform_6, window_bounds = array<i64: 4, 8, 32>}, {pipeline_mode = #tpu.pipeline_mode<synchronous>, transform_indices = @transform_7, window_bounds = array<i64: 1, 32>}, {pipeline_mode = #tpu.pipeline_mode<synchronous>, transform_indices = @transform_8, window_bounds = array<i64: 8, 32>}, {pipeline_mode = #tpu.pipeline_mode<synchronous>, transform_indices = @transform_9, window_bounds = array<i64: 8, 32>}, {pipeline_mode = #tpu.pipeline_mode<synchronous>, transform_indices = @transform_10, window_bounds = array<i64: 32, 96>}, {pipeline_mode = #tpu.pipeline_mode<synchronous>, transform_indices = @transform_11, window_bounds = array<i64: 1, 96>}, {pipeline_mode = #tpu.pipeline_mode<synchronous>, transform_indices = @transform_12, window_bounds = array<i64: 4, 8, 32>}, {pipeline_mode = #tpu.pipeline_mode<synchronous>, transform_indices = @transform_13, window_bounds = array<i64: 1, 32>}, {pipeline_mode = #tpu.pipeline_mode<synchronous>, transform_indices = @transform_14, window_bounds = array<i64: 8, 32>}, {pipeline_mode = #tpu.pipeline_mode<synchronous>, transform_indices = @transform_15, window_bounds = array<i64: 8, 32>}, {pipeline_mode = #tpu.pipeline_mode<synchronous>, transform_indices = @transform_16, window_bounds = array<i64: 32, 128>}, {pipeline_mode = #tpu.pipeline_mode<synchronous>, transform_indices = @transform_17, window_bounds = array<i64: 1, 128>}, {pipeline_mode = #tpu.pipeline_mode<synchronous>, transform_indices = @transform_18, window_bounds = array<i64: 128, 32>}, {pipeline_mode = #tpu.pipeline_mode<synchronous>, transform_indices = @transform_19, window_bounds = array<i64: 1, 32>}, {pipeline_mode = #tpu.pipeline_mode<synchronous>, transform_indices = @transform_20, window_bounds = array<i64: 8, 32>}, {pipeline_mode = #tpu.pipeline_mode<synchronous>, transform_indices = @transform_21, window_bounds = array<i64: 8, 32>}, {transform_indices = @transform_22, window_bounds = array<i64: 1, 8, 32>}]} {
    %c0 = arith.constant 0 : index
    %c0_0 = arith.constant 0 : index
    %c0_1 = arith.constant 0 : index
    %0 = vector.load %arg1[%c0, %c0_0, %c0_1] : memref<1x8x32xf32, #tpu.memory_space<vmem>>, vector<1x8x32xf32>
    %1 = vector.shape_cast %0 : vector<1x8x32xf32> to vector<8x32xf32>
    %c0_2 = arith.constant 0 : index
    %c0_3 = arith.constant 0 : index
    %c0_4 = arith.constant 0 : index
    %2 = vector.load %arg2[%c0_2, %c0_3, %c0_4] : memref<1x8x16xf32, #tpu.memory_space<vmem>>, vector<1x8x16xf32>
    %3 = vector.shape_cast %2 : vector<1x8x16xf32> to vector<8x16xf32>
    %c0_5 = arith.constant 0 : index
    %c0_6 = arith.constant 0 : index
    %4 = vector.load %arg3[%c0_5, %c0_6] : memref<32x32xf32, #tpu.memory_space<vmem>>, vector<32x32xf32>
    %cst = arith.constant dense<0.000000e+00> : vector<8x32xf32>
    %5 = tpu.matmul %1, %4, %cst {dimension_numbers = #tpu.dot_dimension_numbers<[1], [0], [0], [1], [0, 0, 1, 1], [], []>} : vector<8x32xf32>, vector<32x32xf32>, vector<8x32xf32> -> vector<8x32xf32>
    %c0_7 = arith.constant 0 : index
    %c0_8 = arith.constant 0 : index
    %6 = vector.load %arg4[%c0_7, %c0_8] : memref<1x32xf32, #tpu.memory_space<vmem>>, vector<1x32xf32>
    %7 = vector.broadcast %6 : vector<1x32xf32> to vector<8x32xf32>
    %8 = arith.addf %5, %7 : vector<8x32xf32>
    %c0_9 = arith.constant 0 : index
    %c0_10 = arith.constant 0 : index
    %9 = vector.load %arg5[%c0_9, %c0_10] : memref<16x64xf32, #tpu.memory_space<vmem>>, vector<16x64xf32>
    %cst_11 = arith.constant dense<0.000000e+00> : vector<8x64xf32>
    %10 = tpu.matmul %3, %9, %cst_11 {dimension_numbers = #tpu.dot_dimension_numbers<[1], [0], [0], [1], [0, 0, 1, 1], [], []>} : vector<8x16xf32>, vector<16x64xf32>, vector<8x64xf32> -> vector<8x64xf32>
    %c0_12 = arith.constant 0 : index
    %c0_13 = arith.constant 0 : index
    %11 = vector.load %arg6[%c0_12, %c0_13] : memref<1x64xf32, #tpu.memory_space<vmem>>, vector<1x64xf32>
    %12 = vector.broadcast %11 : vector<1x64xf32> to vector<8x64xf32>
    %13 = arith.addf %10, %12 : vector<8x64xf32>
    %14 = vector.extract_strided_slice %13 {offsets = [0, 0], sizes = [8, 32], strides = [1, 1]} : vector<8x64xf32> to vector<8x32xf32>
    %15 = vector.extract_strided_slice %13 {offsets = [0, 32], sizes = [8, 32], strides = [1, 1]} : vector<8x64xf32> to vector<8x32xf32>
    %c0_14 = arith.constant 0 : index
    %c0_15 = arith.constant 0 : index
    %c0_16 = arith.constant 0 : index
    %16 = vector.load %arg7[%c0_14, %c0_15, %c0_16] : memref<4x8x32xf32, #tpu.memory_space<vmem>>, vector<4x8x32xf32>
    %c0_17 = arith.constant 0 : index
    %c0_18 = arith.constant 0 : index
    %17 = vector.load %arg8[%c0_17, %c0_18] : memref<1x32xf32, #tpu.memory_space<vmem>>, vector<1x32xf32>
    %c0_19 = arith.constant 0 : index
    %c0_20 = arith.constant 0 : index
    %18 = vector.load %arg9[%c0_19, %c0_20] : memref<8x32xf32, #tpu.memory_space<vmem>>, vector<8x32xf32>
    %c0_21 = arith.constant 0 : index
    %c0_22 = arith.constant 0 : index
    %19 = vector.load %arg10[%c0_21, %c0_22] : memref<8x32xf32, #tpu.memory_space<vmem>>, vector<8x32xf32>
    %20 = vector.extract_strided_slice %8 {offsets = [0, 0], sizes = [8, 8], strides = [1, 1]} : vector<8x32xf32> to vector<8x8xf32>
    %21 = vector.extract_strided_slice %8 {offsets = [0, 8], sizes = [8, 8], strides = [1, 1]} : vector<8x32xf32> to vector<8x8xf32>
    %22 = vector.extract_strided_slice %8 {offsets = [0, 16], sizes = [8, 8], strides = [1, 1]} : vector<8x32xf32> to vector<8x8xf32>
    %23 = vector.extract_strided_slice %8 {offsets = [0, 24], sizes = [8, 8], strides = [1, 1]} : vector<8x32xf32> to vector<8x8xf32>
    %24 = vector.shape_cast %20 : vector<8x8xf32> to vector<1x8x8xf32>
    %25 = vector.shape_cast %21 : vector<8x8xf32> to vector<1x8x8xf32>
    %26 = vector.shape_cast %22 : vector<8x8xf32> to vector<1x8x8xf32>
    %27 = vector.shape_cast %23 : vector<8x8xf32> to vector<1x8x8xf32>
    %28 = tpu.concatenate %24, %25, %26, %27 in 0 : vector<1x8x8xf32>, vector<1x8x8xf32>, vector<1x8x8xf32>, vector<1x8x8xf32> -> vector<4x8x8xf32>
    %cst_23 = arith.constant 1.250000e-01 : f32
    %29 = vector.broadcast %cst_23 : f32 to vector<4x8x8xf32>
    %30 = arith.mulf %28, %29 : vector<4x8x8xf32>
    %31 = vector.extract_strided_slice %14 {offsets = [0, 0], sizes = [8, 8], strides = [1, 1]} : vector<8x32xf32> to vector<8x8xf32>
    %32 = vector.extract_strided_slice %14 {offsets = [0, 8], sizes = [8, 8], strides = [1, 1]} : vector<8x32xf32> to vector<8x8xf32>
    %33 = vector.extract_strided_slice %14 {offsets = [0, 16], sizes = [8, 8], strides = [1, 1]} : vector<8x32xf32> to vector<8x8xf32>
    %34 = vector.extract_strided_slice %14 {offsets = [0, 24], sizes = [8, 8], strides = [1, 1]} : vector<8x32xf32> to vector<8x8xf32>
    %35 = vector.shape_cast %31 : vector<8x8xf32> to vector<1x8x8xf32>
    %36 = vector.shape_cast %32 : vector<8x8xf32> to vector<1x8x8xf32>
    %37 = vector.shape_cast %33 : vector<8x8xf32> to vector<1x8x8xf32>
    %38 = vector.shape_cast %34 : vector<8x8xf32> to vector<1x8x8xf32>
    %39 = tpu.concatenate %35, %36, %37, %38 in 0 : vector<1x8x8xf32>, vector<1x8x8xf32>, vector<1x8x8xf32>, vector<1x8x8xf32> -> vector<4x8x8xf32>
    %40 = vector.extract_strided_slice %15 {offsets = [0, 0], sizes = [8, 8], strides = [1, 1]} : vector<8x32xf32> to vector<8x8xf32>
    %41 = vector.extract_strided_slice %15 {offsets = [0, 8], sizes = [8, 8], strides = [1, 1]} : vector<8x32xf32> to vector<8x8xf32>
    %42 = vector.extract_strided_slice %15 {offsets = [0, 16], sizes = [8, 8], strides = [1, 1]} : vector<8x32xf32> to vector<8x8xf32>
    %43 = vector.extract_strided_slice %15 {offsets = [0, 24], sizes = [8, 8], strides = [1, 1]} : vector<8x32xf32> to vector<8x8xf32>
    %44 = vector.shape_cast %40 : vector<8x8xf32> to vector<1x8x8xf32>
    %45 = vector.shape_cast %41 : vector<8x8xf32> to vector<1x8x8xf32>
    %46 = vector.shape_cast %42 : vector<8x8xf32> to vector<1x8x8xf32>
    %47 = vector.shape_cast %43 : vector<8x8xf32> to vector<1x8x8xf32>
    %48 = tpu.concatenate %44, %45, %46, %47 in 0 : vector<1x8x8xf32>, vector<1x8x8xf32>, vector<1x8x8xf32>, vector<1x8x8xf32> -> vector<4x8x8xf32>
    "tpu.trace_start"() <{level = 10 : i32, message = "htd,hfd->htf"}> : () -> ()
    %cst_24 = arith.constant dense<0.000000e+00> : vector<4x8x8xf32>
    %49 = tpu.matmul %30, %39, %cst_24 {dimension_numbers = #tpu.dot_dimension_numbers<[2], [2], [1], [1], [0, 0, 0, 1, 1, 1], [0], [0]>} : vector<4x8x8xf32>, vector<4x8x8xf32>, vector<4x8x8xf32> -> vector<4x8x8xf32>
    "tpu.trace_stop"() : () -> ()
    %cst_25 = arith.constant dense<0xFF800000> : vector<4x8xf32>
    %50 = vector.multi_reduction <maximumf>, %49, %cst_25 [2] : vector<4x8x8xf32> to vector<4x8xf32>
    %51 = vector.shape_cast %50 : vector<4x8xf32> to vector<4x8x1xf32>
    %52 = vector.broadcast %51 : vector<4x8x1xf32> to vector<4x8x8xf32>
    %53 = arith.subf %49, %52 : vector<4x8x8xf32>
    %54 = math.exp %53 : vector<4x8x8xf32>
    %cst_26 = arith.constant dense<0.000000e+00> : vector<4x8xf32>
    %55 = vector.multi_reduction <add>, %54, %cst_26 [2] : vector<4x8x8xf32> to vector<4x8xf32>
    %56 = vector.shape_cast %55 : vector<4x8xf32> to vector<4x8x1xf32>
    %57 = tpu.reciprocal %56 {approx = true} : vector<4x8x1xf32> -> vector<4x8x1xf32>
    %58 = vector.broadcast %57 : vector<4x8x1xf32> to vector<4x8x8xf32>
    %59 = arith.mulf %54, %58 : vector<4x8x8xf32>
    "tpu.trace_start"() <{level = 10 : i32, message = "htf,hfd->htd"}> : () -> ()
    %cst_27 = arith.constant dense<0.000000e+00> : vector<4x8x8xf32>
    %60 = tpu.matmul %59, %48, %cst_27 {dimension_numbers = #tpu.dot_dimension_numbers<[2], [1], [1], [2], [0, 0, 0, 1, 1, 2], [0], [0]>} : vector<4x8x8xf32>, vector<4x8x8xf32>, vector<4x8x8xf32> -> vector<4x8x8xf32>
    "tpu.trace_stop"() : () -> ()
    "tpu.trace_start"() <{level = 10 : i32, message = "htd,hdo->hto"}> : () -> ()
    %cst_28 = arith.constant dense<0.000000e+00> : vector<4x8x32xf32>
    %61 = tpu.matmul %60, %16, %cst_28 {dimension_numbers = #tpu.dot_dimension_numbers<[2], [1], [1], [2], [0, 0, 0, 1, 1, 2], [0], [0]>} : vector<4x8x8xf32>, vector<4x8x32xf32>, vector<4x8x32xf32> -> vector<4x8x32xf32>
    "tpu.trace_stop"() : () -> ()
    %cst_29 = arith.constant dense<0.000000e+00> : vector<8x32xf32>
    %62 = vector.multi_reduction <add>, %61, %cst_29 [0] : vector<4x8x32xf32> to vector<8x32xf32>
    %63 = vector.broadcast %17 : vector<1x32xf32> to vector<8x32xf32>
    %64 = arith.addf %62, %63 : vector<8x32xf32>
    %65 = arith.addf %1, %64 : vector<8x32xf32>
    %66 = vector.shape_cast %65 : vector<8x32xf32> to vector<1x8x32xf32>
    %cst_30 = arith.constant dense<0.000000e+00> : vector<1xf32>
    %67 = vector.multi_reduction <add>, %66, %cst_30 [1, 2] : vector<1x8x32xf32> to vector<1xf32>
    %68 = vector.shape_cast %67 : vector<1xf32> to vector<1x1x1xf32>
    %69 = vector.extract %68[0, 0, 0] : f32 from vector<1x1x1xf32>
    %cst_31 = arith.constant 2.560000e+02 : f32
    %70 = arith.divf %69, %cst_31 : f32
    %71 = vector.broadcast %70 : f32 to vector<8x32xf32>
    %72 = arith.subf %65, %71 : vector<8x32xf32>
    %73 = arith.mulf %72, %72 : vector<8x32xf32>
    %74 = vector.shape_cast %73 : vector<8x32xf32> to vector<1x8x32xf32>
    %cst_32 = arith.constant dense<0.000000e+00> : vector<1xf32>
    %75 = vector.multi_reduction <add>, %74, %cst_32 [1, 2] : vector<1x8x32xf32> to vector<1xf32>
    %76 = vector.shape_cast %75 : vector<1xf32> to vector<1x1x1xf32>
    %77 = vector.extract %76[0, 0, 0] : f32 from vector<1x1x1xf32>
    %cst_33 = arith.constant 2.560000e+02 : f32
    %78 = arith.divf %77, %cst_33 : f32
    %79 = vector.broadcast %70 : f32 to vector<8x32xf32>
    %80 = arith.subf %65, %79 : vector<8x32xf32>
    %cst_34 = arith.constant 9.99999974E-6 : f32
    %81 = arith.addf %78, %cst_34 : f32
    %82 = math.rsqrt %81 : f32
    %83 = vector.broadcast %82 : f32 to vector<8x32xf32>
    %84 = arith.mulf %80, %83 : vector<8x32xf32>
    %85 = arith.mulf %84, %18 : vector<8x32xf32>
    %86 = arith.addf %85, %19 : vector<8x32xf32>
    %c0_35 = arith.constant 0 : index
    %c0_36 = arith.constant 0 : index
    %87 = vector.load %arg11[%c0_35, %c0_36] : memref<32x96xf32, #tpu.memory_space<vmem>>, vector<32x96xf32>
    %cst_37 = arith.constant dense<0.000000e+00> : vector<8x96xf32>
    %88 = tpu.matmul %86, %87, %cst_37 {dimension_numbers = #tpu.dot_dimension_numbers<[1], [0], [0], [1], [0, 0, 1, 1], [], []>} : vector<8x32xf32>, vector<32x96xf32>, vector<8x96xf32> -> vector<8x96xf32>
    %c0_38 = arith.constant 0 : index
    %c0_39 = arith.constant 0 : index
    %89 = vector.load %arg12[%c0_38, %c0_39] : memref<1x96xf32, #tpu.memory_space<vmem>>, vector<1x96xf32>
    %90 = vector.broadcast %89 : vector<1x96xf32> to vector<8x96xf32>
    %91 = arith.addf %88, %90 : vector<8x96xf32>
    %92 = vector.extract_strided_slice %91 {offsets = [0, 0], sizes = [8, 32], strides = [1, 1]} : vector<8x96xf32> to vector<8x32xf32>
    %93 = vector.extract_strided_slice %91 {offsets = [0, 32], sizes = [8, 32], strides = [1, 1]} : vector<8x96xf32> to vector<8x32xf32>
    %94 = vector.extract_strided_slice %91 {offsets = [0, 64], sizes = [8, 32], strides = [1, 1]} : vector<8x96xf32> to vector<8x32xf32>
    %c0_40 = arith.constant 0 : index
    %c0_41 = arith.constant 0 : index
    %c0_42 = arith.constant 0 : index
    %95 = vector.load %arg13[%c0_40, %c0_41, %c0_42] : memref<4x8x32xf32, #tpu.memory_space<vmem>>, vector<4x8x32xf32>
    %c0_43 = arith.constant 0 : index
    %c0_44 = arith.constant 0 : index
    %96 = vector.load %arg14[%c0_43, %c0_44] : memref<1x32xf32, #tpu.memory_space<vmem>>, vector<1x32xf32>
    %c0_45 = arith.constant 0 : index
    %c0_46 = arith.constant 0 : index
    %97 = vector.load %arg15[%c0_45, %c0_46] : memref<8x32xf32, #tpu.memory_space<vmem>>, vector<8x32xf32>
    %c0_47 = arith.constant 0 : index
    %c0_48 = arith.constant 0 : index
    %98 = vector.load %arg16[%c0_47, %c0_48] : memref<8x32xf32, #tpu.memory_space<vmem>>, vector<8x32xf32>
    %99 = vector.extract_strided_slice %92 {offsets = [0, 0], sizes = [8, 8], strides = [1, 1]} : vector<8x32xf32> to vector<8x8xf32>
    %100 = vector.extract_strided_slice %92 {offsets = [0, 8], sizes = [8, 8], strides = [1, 1]} : vector<8x32xf32> to vector<8x8xf32>
    %101 = vector.extract_strided_slice %92 {offsets = [0, 16], sizes = [8, 8], strides = [1, 1]} : vector<8x32xf32> to vector<8x8xf32>
    %102 = vector.extract_strided_slice %92 {offsets = [0, 24], sizes = [8, 8], strides = [1, 1]} : vector<8x32xf32> to vector<8x8xf32>
    %103 = vector.shape_cast %99 : vector<8x8xf32> to vector<1x8x8xf32>
    %104 = vector.shape_cast %100 : vector<8x8xf32> to vector<1x8x8xf32>
    %105 = vector.shape_cast %101 : vector<8x8xf32> to vector<1x8x8xf32>
    %106 = vector.shape_cast %102 : vector<8x8xf32> to vector<1x8x8xf32>
    %107 = tpu.concatenate %103, %104, %105, %106 in 0 : vector<1x8x8xf32>, vector<1x8x8xf32>, vector<1x8x8xf32>, vector<1x8x8xf32> -> vector<4x8x8xf32>
    %cst_49 = arith.constant 1.250000e-01 : f32
    %108 = vector.broadcast %cst_49 : f32 to vector<4x8x8xf32>
    %109 = arith.mulf %107, %108 : vector<4x8x8xf32>
    %110 = vector.extract_strided_slice %93 {offsets = [0, 0], sizes = [8, 8], strides = [1, 1]} : vector<8x32xf32> to vector<8x8xf32>
    %111 = vector.extract_strided_slice %93 {offsets = [0, 8], sizes = [8, 8], strides = [1, 1]} : vector<8x32xf32> to vector<8x8xf32>
    %112 = vector.extract_strided_slice %93 {offsets = [0, 16], sizes = [8, 8], strides = [1, 1]} : vector<8x32xf32> to vector<8x8xf32>
    %113 = vector.extract_strided_slice %93 {offsets = [0, 24], sizes = [8, 8], strides = [1, 1]} : vector<8x32xf32> to vector<8x8xf32>
    %114 = vector.shape_cast %110 : vector<8x8xf32> to vector<1x8x8xf32>
    %115 = vector.shape_cast %111 : vector<8x8xf32> to vector<1x8x8xf32>
    %116 = vector.shape_cast %112 : vector<8x8xf32> to vector<1x8x8xf32>
    %117 = vector.shape_cast %113 : vector<8x8xf32> to vector<1x8x8xf32>
    %118 = tpu.concatenate %114, %115, %116, %117 in 0 : vector<1x8x8xf32>, vector<1x8x8xf32>, vector<1x8x8xf32>, vector<1x8x8xf32> -> vector<4x8x8xf32>
    %119 = vector.extract_strided_slice %94 {offsets = [0, 0], sizes = [8, 8], strides = [1, 1]} : vector<8x32xf32> to vector<8x8xf32>
    %120 = vector.extract_strided_slice %94 {offsets = [0, 8], sizes = [8, 8], strides = [1, 1]} : vector<8x32xf32> to vector<8x8xf32>
    %121 = vector.extract_strided_slice %94 {offsets = [0, 16], sizes = [8, 8], strides = [1, 1]} : vector<8x32xf32> to vector<8x8xf32>
    %122 = vector.extract_strided_slice %94 {offsets = [0, 24], sizes = [8, 8], strides = [1, 1]} : vector<8x32xf32> to vector<8x8xf32>
    %123 = vector.shape_cast %119 : vector<8x8xf32> to vector<1x8x8xf32>
    %124 = vector.shape_cast %120 : vector<8x8xf32> to vector<1x8x8xf32>
    %125 = vector.shape_cast %121 : vector<8x8xf32> to vector<1x8x8xf32>
    %126 = vector.shape_cast %122 : vector<8x8xf32> to vector<1x8x8xf32>
    %127 = tpu.concatenate %123, %124, %125, %126 in 0 : vector<1x8x8xf32>, vector<1x8x8xf32>, vector<1x8x8xf32>, vector<1x8x8xf32> -> vector<4x8x8xf32>
    "tpu.trace_start"() <{level = 10 : i32, message = "htd,hfd->htf"}> : () -> ()
    %cst_50 = arith.constant dense<0.000000e+00> : vector<4x8x8xf32>
    %128 = tpu.matmul %109, %118, %cst_50 {dimension_numbers = #tpu.dot_dimension_numbers<[2], [2], [1], [1], [0, 0, 0, 1, 1, 1], [0], [0]>} : vector<4x8x8xf32>, vector<4x8x8xf32>, vector<4x8x8xf32> -> vector<4x8x8xf32>
    "tpu.trace_stop"() : () -> ()
    %cst_51 = arith.constant dense<0xFF800000> : vector<4x8xf32>
    %129 = vector.multi_reduction <maximumf>, %128, %cst_51 [2] : vector<4x8x8xf32> to vector<4x8xf32>
    %130 = vector.shape_cast %129 : vector<4x8xf32> to vector<4x8x1xf32>
    %131 = vector.broadcast %130 : vector<4x8x1xf32> to vector<4x8x8xf32>
    %132 = arith.subf %128, %131 : vector<4x8x8xf32>
    %133 = math.exp %132 : vector<4x8x8xf32>
    %cst_52 = arith.constant dense<0.000000e+00> : vector<4x8xf32>
    %134 = vector.multi_reduction <add>, %133, %cst_52 [2] : vector<4x8x8xf32> to vector<4x8xf32>
    %135 = vector.shape_cast %134 : vector<4x8xf32> to vector<4x8x1xf32>
    %136 = tpu.reciprocal %135 {approx = true} : vector<4x8x1xf32> -> vector<4x8x1xf32>
    %137 = vector.broadcast %136 : vector<4x8x1xf32> to vector<4x8x8xf32>
    %138 = arith.mulf %133, %137 : vector<4x8x8xf32>
    "tpu.trace_start"() <{level = 10 : i32, message = "htf,hfd->htd"}> : () -> ()
    %cst_53 = arith.constant dense<0.000000e+00> : vector<4x8x8xf32>
    %139 = tpu.matmul %138, %127, %cst_53 {dimension_numbers = #tpu.dot_dimension_numbers<[2], [1], [1], [2], [0, 0, 0, 1, 1, 2], [0], [0]>} : vector<4x8x8xf32>, vector<4x8x8xf32>, vector<4x8x8xf32> -> vector<4x8x8xf32>
    "tpu.trace_stop"() : () -> ()
    "tpu.trace_start"() <{level = 10 : i32, message = "htd,hdo->hto"}> : () -> ()
    %cst_54 = arith.constant dense<0.000000e+00> : vector<4x8x32xf32>
    %140 = tpu.matmul %139, %95, %cst_54 {dimension_numbers = #tpu.dot_dimension_numbers<[2], [1], [1], [2], [0, 0, 0, 1, 1, 2], [0], [0]>} : vector<4x8x8xf32>, vector<4x8x32xf32>, vector<4x8x32xf32> -> vector<4x8x32xf32>
    "tpu.trace_stop"() : () -> ()
    %cst_55 = arith.constant dense<0.000000e+00> : vector<8x32xf32>
    %141 = vector.multi_reduction <add>, %140, %cst_55 [0] : vector<4x8x32xf32> to vector<8x32xf32>
    %142 = vector.broadcast %96 : vector<1x32xf32> to vector<8x32xf32>
    %143 = arith.addf %141, %142 : vector<8x32xf32>
    %144 = arith.addf %86, %143 : vector<8x32xf32>
    %145 = vector.shape_cast %144 : vector<8x32xf32> to vector<1x8x32xf32>
    %cst_56 = arith.constant dense<0.000000e+00> : vector<1xf32>
    %146 = vector.multi_reduction <add>, %145, %cst_56 [1, 2] : vector<1x8x32xf32> to vector<1xf32>
    %147 = vector.shape_cast %146 : vector<1xf32> to vector<1x1x1xf32>
    %148 = vector.extract %147[0, 0, 0] : f32 from vector<1x1x1xf32>
    %cst_57 = arith.constant 2.560000e+02 : f32
    %149 = arith.divf %148, %cst_57 : f32
    %150 = vector.broadcast %149 : f32 to vector<8x32xf32>
    %151 = arith.subf %144, %150 : vector<8x32xf32>
    %152 = arith.mulf %151, %151 : vector<8x32xf32>
    %153 = vector.shape_cast %152 : vector<8x32xf32> to vector<1x8x32xf32>
    %cst_58 = arith.constant dense<0.000000e+00> : vector<1xf32>
    %154 = vector.multi_reduction <add>, %153, %cst_58 [1, 2] : vector<1x8x32xf32> to vector<1xf32>
    %155 = vector.shape_cast %154 : vector<1xf32> to vector<1x1x1xf32>
    %156 = vector.extract %155[0, 0, 0] : f32 from vector<1x1x1xf32>
    %cst_59 = arith.constant 2.560000e+02 : f32
    %157 = arith.divf %156, %cst_59 : f32
    %158 = vector.broadcast %149 : f32 to vector<8x32xf32>
    %159 = arith.subf %144, %158 : vector<8x32xf32>
    %cst_60 = arith.constant 9.99999974E-6 : f32
    %160 = arith.addf %157, %cst_60 : f32
    %161 = math.rsqrt %160 : f32
    %162 = vector.broadcast %161 : f32 to vector<8x32xf32>
    %163 = arith.mulf %159, %162 : vector<8x32xf32>
    %164 = arith.mulf %163, %97 : vector<8x32xf32>
    %165 = arith.addf %164, %98 : vector<8x32xf32>
    %c0_61 = arith.constant 0 : index
    %c0_62 = arith.constant 0 : index
    %166 = vector.load %arg17[%c0_61, %c0_62] : memref<32x128xf32, #tpu.memory_space<vmem>>, vector<32x128xf32>
    %cst_63 = arith.constant dense<0.000000e+00> : vector<8x128xf32>
    %167 = tpu.matmul %165, %166, %cst_63 {dimension_numbers = #tpu.dot_dimension_numbers<[1], [0], [0], [1], [0, 0, 1, 1], [], []>} : vector<8x32xf32>, vector<32x128xf32>, vector<8x128xf32> -> vector<8x128xf32>
    %c0_64 = arith.constant 0 : index
    %c0_65 = arith.constant 0 : index
    %168 = vector.load %arg18[%c0_64, %c0_65] : memref<1x128xf32, #tpu.memory_space<vmem>>, vector<1x128xf32>
    %169 = vector.broadcast %168 : vector<1x128xf32> to vector<8x128xf32>
    %170 = arith.addf %167, %169 : vector<8x128xf32>
    %cst_66 = arith.constant 0.000000e+00 : f32
    %171 = vector.broadcast %cst_66 : f32 to vector<8x128xf32>
    %172 = arith.maximumf %170, %171 : vector<8x128xf32>
    %c0_67 = arith.constant 0 : index
    %c0_68 = arith.constant 0 : index
    %173 = vector.load %arg19[%c0_67, %c0_68] : memref<128x32xf32, #tpu.memory_space<vmem>>, vector<128x32xf32>
    %cst_69 = arith.constant dense<0.000000e+00> : vector<8x32xf32>
    %174 = tpu.matmul %172, %173, %cst_69 {dimension_numbers = #tpu.dot_dimension_numbers<[1], [0], [0], [1], [0, 0, 1, 1], [], []>} : vector<8x128xf32>, vector<128x32xf32>, vector<8x32xf32> -> vector<8x32xf32>
    %c0_70 = arith.constant 0 : index
    %c0_71 = arith.constant 0 : index
    %175 = vector.load %arg20[%c0_70, %c0_71] : memref<1x32xf32, #tpu.memory_space<vmem>>, vector<1x32xf32>
    %176 = vector.broadcast %175 : vector<1x32xf32> to vector<8x32xf32>
    %177 = arith.addf %174, %176 : vector<8x32xf32>
    %178 = arith.addf %177, %165 : vector<8x32xf32>
    %c0_72 = arith.constant 0 : index
    %c0_73 = arith.constant 0 : index
    %179 = vector.load %arg21[%c0_72, %c0_73] : memref<8x32xf32, #tpu.memory_space<vmem>>, vector<8x32xf32>
    %c0_74 = arith.constant 0 : index
    %c0_75 = arith.constant 0 : index
    %180 = vector.load %arg22[%c0_74, %c0_75] : memref<8x32xf32, #tpu.memory_space<vmem>>, vector<8x32xf32>
    %181 = vector.shape_cast %178 : vector<8x32xf32> to vector<1x8x32xf32>
    %cst_76 = arith.constant dense<0.000000e+00> : vector<1xf32>
    %182 = vector.multi_reduction <add>, %181, %cst_76 [1, 2] : vector<1x8x32xf32> to vector<1xf32>
    %183 = vector.shape_cast %182 : vector<1xf32> to vector<1x1x1xf32>
    %184 = vector.extract %183[0, 0, 0] : f32 from vector<1x1x1xf32>
    %cst_77 = arith.constant 2.560000e+02 : f32
    %185 = arith.divf %184, %cst_77 : f32
    %186 = vector.broadcast %185 : f32 to vector<8x32xf32>
    %187 = arith.subf %178, %186 : vector<8x32xf32>
    %188 = arith.mulf %187, %187 : vector<8x32xf32>
    %189 = vector.shape_cast %188 : vector<8x32xf32> to vector<1x8x32xf32>
    %cst_78 = arith.constant dense<0.000000e+00> : vector<1xf32>
    %190 = vector.multi_reduction <add>, %189, %cst_78 [1, 2] : vector<1x8x32xf32> to vector<1xf32>
    %191 = vector.shape_cast %190 : vector<1xf32> to vector<1x1x1xf32>
    %192 = vector.extract %191[0, 0, 0] : f32 from vector<1x1x1xf32>
    %cst_79 = arith.constant 2.560000e+02 : f32
    %193 = arith.divf %192, %cst_79 : f32
    %194 = vector.broadcast %185 : f32 to vector<8x32xf32>
    %195 = arith.subf %178, %194 : vector<8x32xf32>
    %cst_80 = arith.constant 9.99999974E-6 : f32
    %196 = arith.addf %193, %cst_80 : f32
    %197 = math.rsqrt %196 : f32
    %198 = vector.broadcast %197 : f32 to vector<8x32xf32>
    %199 = arith.mulf %195, %198 : vector<8x32xf32>
    %200 = arith.mulf %199, %179 : vector<8x32xf32>
    %201 = arith.addf %200, %180 : vector<8x32xf32>
    %c0_81 = arith.constant 0 : index
    %c0_82 = arith.constant 0 : index
    %c0_83 = arith.constant 0 : index
    %202 = vector.load %arg23[%c0_81, %c0_82, %c0_83] : memref<1x8x32xf32, #tpu.memory_space<vmem>>, vector<1x8x32xf32>
    %203 = vector.shape_cast %202 : vector<1x8x32xf32> to vector<8x32xf32>
    %204 = vector.shape_cast %201 : vector<8x32xf32> to vector<1x8x32xf32>
    tpu.vector_store %arg23[%c0_81, %c0_82, %c0_83], %204 {strides = array<i32>} : memref<1x8x32xf32, #tpu.memory_space<vmem>>, vector<1x8x32xf32>,
    return
  }
  func.func @transform_0(%arg0: i32) -> (i32, i32, i32) {
    %c0_i32 = arith.constant 0 : i32
    %c0_i32_0 = arith.constant 0 : i32
    %c0_i32_1 = arith.constant 0 : i32
    return %arg0, %c0_i32, %c0_i32_0 : i32, i32, i32
  }
  func.func @transform_1(%arg0: i32) -> (i32, i32, i32) {
    %c0_i32 = arith.constant 0 : i32
    %c0_i32_0 = arith.constant 0 : i32
    %c0_i32_1 = arith.constant 0 : i32
    return %arg0, %c0_i32, %c0_i32_0 : i32, i32, i32
  }
  func.func @transform_2(%arg0: i32) -> (i32, i32) {
    %c0_i32 = arith.constant 0 : i32
    %c0_i32_0 = arith.constant 0 : i32
    %c0_i32_1 = arith.constant 0 : i32
    return %c0_i32, %c0_i32_0 : i32, i32
  }
  func.func @transform_3(%arg0: i32) -> (i32, i32) {
    %c0_i32 = arith.constant 0 : i32
    %c0_i32_0 = arith.constant 0 : i32
    %c0_i32_1 = arith.constant 0 : i32
    return %c0_i32, %c0_i32_0 : i32, i32
  }
  func.func @transform_4(%arg0: i32) -> (i32, i32) {
    %c0_i32 = arith.constant 0 : i32
    %c0_i32_0 = arith.constant 0 : i32
    %c0_i32_1 = arith.constant 0 : i32
    return %c0_i32, %c0_i32_0 : i32, i32
  }
  func.func @transform_5(%arg0: i32) -> (i32, i32) {
    %c0_i32 = arith.constant 0 : i32
    %c0_i32_0 = arith.constant 0 : i32
    %c0_i32_1 = arith.constant 0 : i32
    return %c0_i32, %c0_i32_0 : i32, i32
  }
  func.func @transform_6(%arg0: i32) -> (i32, i32, i32) {
    %c0_i32 = arith.constant 0 : i32
    %c0_i32_0 = arith.constant 0 : i32
    %c0_i32_1 = arith.constant 0 : i32
    %c0_i32_2 = arith.constant 0 : i32
    return %c0_i32, %c0_i32_0, %c0_i32_1 : i32, i32, i32
  }
  func.func @transform_7(%arg0: i32) -> (i32, i32) {
    %c0_i32 = arith.constant 0 : i32
    %c0_i32_0 = arith.constant 0 : i32
    %c0_i32_1 = arith.constant 0 : i32
    return %c0_i32, %c0_i32_0 : i32, i32
  }
  func.func @transform_8(%arg0: i32) -> (i32, i32) {
    %c0_i32 = arith.constant 0 : i32
    %c0_i32_0 = arith.constant 0 : i32
    %c0_i32_1 = arith.constant 0 : i32
    return %c0_i32, %c0_i32_0 : i32, i32
  }
  func.func @transform_9(%arg0: i32) -> (i32, i32) {
    %c0_i32 = arith.constant 0 : i32
    %c0_i32_0 = arith.constant 0 : i32
    %c0_i32_1 = arith.constant 0 : i32
    return %c0_i32, %c0_i32_0 : i32, i32
  }
  func.func @transform_10(%arg0: i32) -> (i32, i32) {
    %c0_i32 = arith.constant 0 : i32
    %c0_i32_0 = arith.constant 0 : i32
    %c0_i32_1 = arith.constant 0 : i32
    return %c0_i32, %c0_i32_0 : i32, i32
  }
  func.func @transform_11(%arg0: i32) -> (i32, i32) {
    %c0_i32 = arith.constant 0 : i32
    %c0_i32_0 = arith.constant 0 : i32
    %c0_i32_1 = arith.constant 0 : i32
    return %c0_i32, %c0_i32_0 : i32, i32
  }
  func.func @transform_12(%arg0: i32) -> (i32, i32, i32) {
    %c0_i32 = arith.constant 0 : i32
    %c0_i32_0 = arith.constant 0 : i32
    %c0_i32_1 = arith.constant 0 : i32
    %c0_i32_2 = arith.constant 0 : i32
    return %c0_i32, %c0_i32_0, %c0_i32_1 : i32, i32, i32
  }
  func.func @transform_13(%arg0: i32) -> (i32, i32) {
    %c0_i32 = arith.constant 0 : i32
    %c0_i32_0 = arith.constant 0 : i32
    %c0_i32_1 = arith.constant 0 : i32
    return %c0_i32, %c0_i32_0 : i32, i32
  }
  func.func @transform_14(%arg0: i32) -> (i32, i32) {
    %c0_i32 = arith.constant 0 : i32
    %c0_i32_0 = arith.constant 0 : i32
    %c0_i32_1 = arith.constant 0 : i32
    return %c0_i32, %c0_i32_0 : i32, i32
  }
  func.func @transform_15(%arg0: i32) -> (i32, i32) {
    %c0_i32 = arith.constant 0 : i32
    %c0_i32_0 = arith.constant 0 : i32
    %c0_i32_1 = arith.constant 0 : i32
    return %c0_i32, %c0_i32_0 : i32, i32
  }
  func.func @transform_16(%arg0: i32) -> (i32, i32) {
    %c0_i32 = arith.constant 0 : i32
    %c0_i32_0 = arith.constant 0 : i32
    %c0_i32_1 = arith.constant 0 : i32
    return %c0_i32, %c0_i32_0 : i32, i32
  }
  func.func @transform_17(%arg0: i32) -> (i32, i32) {
    %c0_i32 = arith.constant 0 : i32
    %c0_i32_0 = arith.constant 0 : i32
    %c0_i32_1 = arith.constant 0 : i32
    return %c0_i32, %c0_i32_0 : i32, i32
  }
  func.func @transform_18(%arg0: i32) -> (i32, i32) {
    %c0_i32 = arith.constant 0 : i32
    %c0_i32_0 = arith.constant 0 : i32
    %c0_i32_1 = arith.constant 0 : i32
    return %c0_i32, %c0_i32_0 : i32, i32
  }
  func.func @transform_19(%arg0: i32) -> (i32, i32) {
    %c0_i32 = arith.constant 0 : i32
    %c0_i32_0 = arith.constant 0 : i32
    %c0_i32_1 = arith.constant 0 : i32
    return %c0_i32, %c0_i32_0 : i32, i32
  }
  func.func @transform_20(%arg0: i32) -> (i32, i32) {
    %c0_i32 = arith.constant 0 : i32
    %c0_i32_0 = arith.constant 0 : i32
    %c0_i32_1 = arith.constant 0 : i32
    return %c0_i32, %c0_i32_0 : i32, i32
  }
  func.func @transform_21(%arg0: i32) -> (i32, i32) {
    %c0_i32 = arith.constant 0 : i32
    %c0_i32_0 = arith.constant 0 : i32
    %c0_i32_1 = arith.constant 0 : i32
    return %c0_i32, %c0_i32_0 : i32, i32
  }
  func.func @transform_22(%arg0: i32) -> (i32, i32, i32) {
    %c0_i32 = arith.constant 0 : i32
    %c0_i32_0 = arith.constant 0 : i32
    %c0_i32_1 = arith.constant 0 : i32
    return %arg0, %c0_i32, %c0_i32_0 : i32, i32, i32
  }
}

</mosaic_0001>

<llo_original>
// kernel: tpu_custom_call.1
$region0: #{tpu_custom_call.1}
  #allocation0 [shape = 'u32[]', space=smem, size = 0x4, offset = 0x4, fixed_abs, tag = 'smem constant byte address 0x4 - core index']
  #allocation1 [shape = 'u32[72,128]{1,0:T(1,128)}', space=vmem, size = 0x9000, scoped, tag = 'internal scratch']
  %s0 = inlined_call_operand.hbm [shape: f32[2,8,32], index: 0, kind: input, shape index: {}]
  %s1 = inlined_call_operand.hbm [shape: f32[2,8,16], index: 1, kind: input, shape index: {}]
  %s2 = inlined_call_operand.vmem [shape: f32[32,32], index: 2, kind: input, shape index: {}]
  %s3 = inlined_call_operand.vmem [shape: f32[1,32], index: 3, kind: input, shape index: {}]
  %s4 = inlined_call_operand.hbm [shape: f32[16,64], index: 4, kind: input, shape index: {}]
  %s5 = inlined_call_operand.hbm [shape: f32[1,64], index: 5, kind: input, shape index: {}]
  %s6 = inlined_call_operand.vmem [shape: f32[4,8,32], index: 6, kind: input, shape index: {}]
  %s7 = inlined_call_operand.hbm [shape: f32[1,32], index: 7, kind: input, shape index: {}]
  %s8 = inlined_call_operand.hbm [shape: f32[8,32], index: 8, kind: input, shape index: {}]
  %s9 = inlined_call_operand.hbm [shape: f32[8,32], index: 9, kind: input, shape index: {}]
  %s10 = inlined_call_operand.vmem [shape: f32[32,96], index: 10, kind: input, shape index: {}]
  %s11 = inlined_call_operand.hbm [shape: f32[1,96], index: 11, kind: input, shape index: {}]
  %s12 = inlined_call_operand.vmem [shape: f32[4,8,32], index: 12, kind: input, shape index: {}]
  %s13 = inlined_call_operand.hbm [shape: f32[1,32], index: 13, kind: input, shape index: {}]
  %s14 = inlined_call_operand.vmem [shape: f32[8,32], index: 14, kind: input, shape index: {}]
  %s15 = inlined_call_operand.hbm [shape: f32[8,32], index: 15, kind: input, shape index: {}]
  %s16 = inlined_call_operand.vmem [shape: f32[32,128], index: 16, kind: input, shape index: {}]
  %s17 = inlined_call_operand.hbm [shape: f32[1,128], index: 17, kind: input, shape index: {}]
  %s18 = inlined_call_operand.vmem [shape: f32[128,32], index: 18, kind: input, shape index: {}]
  %s19 = inlined_call_operand.hbm [shape: f32[1,32], index: 19, kind: input, shape index: {}]
  %s20 = inlined_call_operand.vmem [shape: f32[8,32], index: 20, kind: input, shape index: {}]
  %s21 = inlined_call_operand.hbm [shape: f32[8,32], index: 21, kind: input, shape index: {}]
  %s22 = inlined_call_operand.hbm [shape: f32[2,8,32], index: 22, kind: output, shape index: {}]
  %s23 = sld [smem:[#allocation0]]
  $region173: #{tpu_custom_call.1} parent=0
    _
  %s25 = ssub.s32 1, %s23
  %s26 = scalar_select 0, %s25, %s23
  $region1: #{tpu_custom_call.1} parent=0
    #allocation2 [shape = 'u8[8192]{0}', space=vmem, size = 0x2000, scoped, tag = 'input window, operand 0']
    #allocation3 [shape = 's32[2]{0}', space=sflag, size = 0x8, scoped, tag = 'scoped memory for tpu_custom_call.1']
    #allocation4 [shape = 's32[2]{0}', space=sflag, size = 0x8, scoped, tag = 'scoped memory for tpu_custom_call.1']
    #allocation5 [shape = 'u8[8192]{0}', space=vmem, size = 0x2000, scoped, tag = 'input window, operand 1']
    #allocation6 [shape = 's32[2]{0}', space=sflag, size = 0x8, scoped, tag = 'scoped memory for tpu_custom_call.1']
    #allocation7 [shape = 'u8[8192]{0}', space=vmem, size = 0x2000, scoped, tag = 'input window, operand 4, single buffered']
    #allocation8 [shape = 'u8[512]{0}', space=vmem, size = 0x400, scoped, tag = 'input window, operand 5, single buffered']
    #allocation9 [shape = 's32[1]{0}', space=sflag, size = 0x4, scoped, tag = 'scoped memory for tpu_custom_call.1']
    #allocation10 [shape = 'u8[512]{0}', space=vmem, size = 0x400, scoped, tag = 'input window, operand 7, single buffered']
    #allocation11 [shape = 'u8[4096]{0}', space=vmem, size = 0x1000, scoped, tag = 'input window, operand 8, single buffered']
    #allocation12 [shape = 's32[1]{0}', space=sflag, size = 0x4, scoped, tag = 'scoped memory for tpu_custom_call.1']
    #allocation13 [shape = 'u8[4096]{0}', space=vmem, size = 0x1000, scoped, tag = 'input window, operand 9, single buffered']
    #allocation14 [shape = 'u8[512]{0}', space=vmem, size = 0x400, scoped, tag = 'input window, operand 11, single buffered']
    #allocation15 [shape = 's32[1]{0}', space=sflag, size = 0x4, scoped, tag = 'scoped memory for tpu_custom_call.1']
    #allocation16 [shape = 'u8[512]{0}', space=vmem, size = 0x400, scoped, tag = 'input window, operand 13, single buffered']
    #allocation17 [shape = 'u8[4096]{0}', space=vmem, size = 0x1000, scoped, tag = 'input window, operand 15, single buffered']
    #allocation18 [shape = 's32[1]{0}', space=sflag, size = 0x4, scoped, tag = 'scoped memory for tpu_custom_call.1']
    #allocation19 [shape = 'u8[512]{0}', space=vmem, size = 0x400, scoped, tag = 'input window, operand 17, single buffered']
    #allocation20 [shape = 'u8[512]{0}', space=vmem, size = 0x400, scoped, tag = 'input window, operand 19, single buffered']
    #allocation21 [shape = 's32[1]{0}', space=sflag, size = 0x4, scoped, tag = 'scoped memory for tpu_custom_call.1']
    #allocation22 [shape = 'u8[4096]{0}', space=vmem, size = 0x1000, scoped, tag = 'input window, operand 21, single buffered']
    #allocation23 [shape = 'u8[8192]{0}', space=vmem, size = 0x2000, scoped, tag = 'output window, operand 0']
    %27 = vsyncpa [#allocation3], 0
    %s28 = scalar_lea.sflag [#allocation3], 1
    %29 = vsyncpa %s28, 0
    %30 = vsyncpa [#allocation6], 0
    %s31 = scalar_lea.sflag [#allocation6], 1
    %32 = vsyncpa %s31, 0
    %33 = vsyncpa [#allocation9], 0
    %34 = vsyncpa [#allocation12], 0
    %35 = vsyncpa [#allocation15], 0
    %36 = vsyncpa [#allocation18], 0
    %37 = vsyncpa [#allocation21], 0
    %38 = vsyncpa [#allocation4], 0
    %s39 = scalar_lea.sflag [#allocation4], 1
    %40 = vsyncpa %s39, 0
    loop: start=0, step=1, limit=4
    $region2: #{tpu_custom_call.1} parent=1 // loop_pre_header
      _
    $region3: #{tpu_custom_call.1} parent=1 // loop_header
      %s42 = sphi 0, %s46
      %p43 = scmp.ge.s32.totalorder %s42, 4
      %s52 = sphi 0, %s54
      %s55 = sphi 0, %s52
      %s56 = sphi 0, %s55
      %s72 = sphi 0, %s56
      %s78 = sphi 0, %s80
      %s81 = sphi 0, %s78
      %s82 = sphi 0, %s81
      %s98 = sphi 0, %s82
      %s102 = sphi 0, %s102
      %s104 = sphi 0, %s102
      %s105 = sphi 0, %s104
      %s119 = sphi 0, %s105
      %s123 = sphi 0, %s123
      %s125 = sphi 0, %s123
      %s126 = sphi 0, %s125
      %s140 = sphi 0, %s126
      %s144 = sphi 0, %s144
      %s146 = sphi 0, %s144
      %s147 = sphi 0, %s146
      %s161 = sphi 0, %s147
      %s165 = sphi 0, %s165
      %s167 = sphi 0, %s165
      %s168 = sphi 0, %s167
      %s182 = sphi 0, %s168
      %s186 = sphi 0, %s186
      %s188 = sphi 0, %s186
      %s189 = sphi 0, %s188
      %s203 = sphi 0, %s189
      %s207 = sphi 0, %s207
      %s209 = sphi 0, %s207
      %s210 = sphi 0, %s209
      %s224 = sphi 0, %s210
      %s228 = sphi 0, %s228
      %s230 = sphi 0, %s228
      %s231 = sphi 0, %s230
      %s245 = sphi 0, %s231
      %s249 = sphi 0, %s249
      %s251 = sphi 0, %s249
      %s252 = sphi 0, %s251
      %s266 = sphi 0, %s252
      %s270 = sphi 0, %s270
      %s272 = sphi 0, %s270
      %s273 = sphi 0, %s272
      %s287 = sphi 0, %s273
      %s291 = sphi 0, %s291
      %s293 = sphi 0, %s291
      %s294 = sphi 0, %s293
      %s308 = sphi 0, %s294
      %s312 = sphi 0, %s312
      %s314 = sphi 0, %s312
      %s315 = sphi 0, %s314
      %s329 = sphi 0, %s315
      %s333 = sphi 0, %s333
      %s335 = sphi 0, %s333
      %s336 = sphi 0, %s335
      %s350 = sphi 0, %s336
      %s354 = sphi 0, %s354
      %s356 = sphi 0, %s354
      %s357 = sphi 0, %s356
      %s371 = sphi 0, %s357
      %s375 = sphi 0, %s375
      %s377 = sphi 0, %s375
      %s378 = sphi 0, %s377
      %s392 = sphi 0, %s378
      %s396 = sphi 0, %s396
      %s398 = sphi 0, %s396
      %s399 = sphi 0, %s398
      %s413 = sphi 0, %s399
      %s417 = sphi 0, %s417
      %s419 = sphi 0, %s417
      %s420 = sphi 0, %s419
      %s434 = sphi 0, %s420
      %s438 = sphi 0, %s438
      %s440 = sphi 0, %s438
      %s441 = sphi 0, %s440
      %s455 = sphi 0, %s441
      %s459 = sphi 0, %s459
      %s461 = sphi 0, %s459
      %s462 = sphi 0, %s461
      %s476 = sphi 0, %s462
      %s480 = sphi 0, %s480
      %s482 = sphi 0, %s480
      %s483 = sphi 0, %s482
      %s497 = sphi 0, %s483
      %s501 = sphi 0, %s501
      %s503 = sphi 0, %s501
      %s504 = sphi 0, %s503
      %s518 = sphi 0, %s504
      %s524 = sphi 0, %s526
      %s527 = sphi 0, %s524
      %s528 = sphi 0, %s527
      %s544 = sphi 0, %s528
    $region4: #{tpu_custom_call.1} parent=1 // loop_header_branch
      %45 = sbr.rel (%p43) target = $region8
    $region5: #{tpu_custom_call.1} parent=1 // loop_body
      %s47 = ssub.s32 %s42, 1
      %s48 = ssub.s32 %s42, 2
      %s49 = sadd.s32 %s42, 1
      %s50 = ssub.s32 %s42, %s49
      %p51 = scmp.eq.s32.totalorder %s50, 0
      %s53 = sadd.s32 %s52, 1
      %s54 = scalar_select %p51, %s52, %s53
      %p57 = pneg %p51
      %p58 = scmp.eq.s32.totalorder %s42, 1
      %p59 = por %p57, %p58
      %p60 = scmp.ne.s32.totalorder %s52, %s55
      %p61 = scmp.eq.s32.totalorder %s42, 0
      %p62 = por %p60, %p61
      %p63 = scmp.ne.s32.totalorder %s52, %s55
      %p64 = scmp.eq.s32.totalorder %s47, 1
      %p65 = por %p63, %p64
      %p66 = scmp.ne.s32.totalorder %s55, %s56
      %p67 = scmp.eq.s32.totalorder %s47, 0
      %p68 = por %p66, %p67
      %p69 = scmp.ne.s32.totalorder %s55, %s56
      %p70 = scmp.eq.s32.totalorder %s48, 1
      %p71 = por %p69, %p70
      %p73 = scmp.ne.s32.totalorder %s56, %s72
      %p74 = scmp.eq.s32.totalorder %s48, 0
      %p75 = por %p73, %p74
      %s76 = ssub.s32 %s42, %s49
      %p77 = scmp.eq.s32.totalorder %s76, 0
      %s79 = sadd.s32 %s78, 1
      %s80 = scalar_select %p77, %s78, %s79
      %p83 = pneg %p77
      %p84 = scmp.eq.s32.totalorder %s42, 1
      %p85 = por %p83, %p84
      %p86 = scmp.ne.s32.totalorder %s78, %s81
      %p87 = scmp.eq.s32.totalorder %s42, 0
      %p88 = por %p86, %p87
      %p89 = scmp.ne.s32.totalorder %s78, %s81
      %p90 = scmp.eq.s32.totalorder %s47, 1
      %p91 = por %p89, %p90
      %p92 = scmp.ne.s32.totalorder %s81, %s82
      %p93 = scmp.eq.s32.totalorder %s47, 0
      %p94 = por %p92, %p93
      %p95 = scmp.ne.s32.totalorder %s81, %s82
      %p96 = scmp.eq.s32.totalorder %s48, 1
      %p97 = por %p95, %p96
      %p99 = scmp.ne.s32.totalorder %s82, %s98
      %p100 = scmp.eq.s32.totalorder %s48, 0
      %p101 = por %p99, %p100
      %s103 = sadd.s32 %s102, 1
      %p106 = scmp.eq.s32.totalorder %s42, 1
      %p107 = scmp.ne.s32.totalorder %s102, %s104
      %p108 = scmp.eq.s32.totalorder %s42, 0
      %p109 = por %p107, %p108
      %p110 = scmp.ne.s32.totalorder %s102, %s104
      %p111 = scmp.eq.s32.totalorder %s47, 1
      %p112 = por %p110, %p111
      %p113 = scmp.ne.s32.totalorder %s104, %s105
      %p114 = scmp.eq.s32.totalorder %s47, 0
      %p115 = por %p113, %p114
      %p116 = scmp.ne.s32.totalorder %s104, %s105
      %p117 = scmp.eq.s32.totalorder %s48, 1
      %p118 = por %p116, %p117
      %p120 = scmp.ne.s32.totalorder %s105, %s119
      %p121 = scmp.eq.s32.totalorder %s48, 0
      %p122 = por %p120, %p121
      %s124 = sadd.s32 %s123, 1
      %p127 = scmp.eq.s32.totalorder %s42, 1
      %p128 = scmp.ne.s32.totalorder %s123, %s125
      %p129 = scmp.eq.s32.totalorder %s42, 0
      %p130 = por %p128, %p129
      %p131 = scmp.ne.s32.totalorder %s123, %s125
      %p132 = scmp.eq.s32.totalorder %s47, 1
      %p133 = por %p131, %p132
      %p134 = scmp.ne.s32.totalorder %s125, %s126
      %p135 = scmp.eq.s32.totalorder %s47, 0
      %p136 = por %p134, %p135
      %p137 = scmp.ne.s32.totalorder %s125, %s126
      %p138 = scmp.eq.s32.totalorder %s48, 1
      %p139 = por %p137, %p138
      %p141 = scmp.ne.s32.totalorder %s126, %s140
      %p142 = scmp.eq.s32.totalorder %s48, 0
      %p143 = por %p141, %p142
      %s145 = sadd.s32 %s144, 1
      %p148 = scmp.eq.s32.totalorder %s42, 1
      %p149 = scmp.ne.s32.totalorder %s144, %s146
      %p150 = scmp.eq.s32.totalorder %s42, 0
      %p151 = por %p149, %p150
      %p152 = scmp.ne.s32.totalorder %s144, %s146
      %p153 = scmp.eq.s32.totalorder %s47, 1
      %p154 = por %p152, %p153
      %p155 = scmp.ne.s32.totalorder %s146, %s147
      %p156 = scmp.eq.s32.totalorder %s47, 0
      %p157 = por %p155, %p156
      %p158 = scmp.ne.s32.totalorder %s146, %s147
      %p159 = scmp.eq.s32.totalorder %s48, 1
      %p160 = por %p158, %p159
      %p162 = scmp.ne.s32.totalorder %s147, %s161
      %p163 = scmp.eq.s32.totalorder %s48, 0
      %p164 = por %p162, %p163
      %s166 = sadd.s32 %s165, 1
      %p169 = scmp.eq.s32.totalorder %s42, 1
      %p170 = scmp.ne.s32.totalorder %s165, %s167
      %p171 = scmp.eq.s32.totalorder %s42, 0
      %p172 = por %p170, %p171
      %p173 = scmp.ne.s32.totalorder %s165, %s167
      %p174 = scmp.eq.s32.totalorder %s47, 1
      %p175 = por %p173, %p174
      %p176 = scmp.ne.s32.totalorder %s167, %s168
      %p177 = scmp.eq.s32.totalorder %s47, 0
      %p178 = por %p176, %p177
      %p179 = scmp.ne.s32.totalorder %s167, %s168
      %p180 = scmp.eq.s32.totalorder %s48, 1
      %p181 = por %p179, %p180
      %p183 = scmp.ne.s32.totalorder %s168, %s182
      %p184 = scmp.eq.s32.totalorder %s48, 0
      %p185 = por %p183, %p184
      %s187 = sadd.s32 %s186, 1
      %p190 = scmp.eq.s32.totalorder %s42, 1
      %p191 = scmp.ne.s32.totalorder %s186, %s188
      %p192 = scmp.eq.s32.totalorder %s42, 0
      %p193 = por %p191, %p192
      %p194 = scmp.ne.s32.totalorder %s186, %s188
      %p195 = scmp.eq.s32.totalorder %s47, 1
      %p196 = por %p194, %p195
      %p197 = scmp.ne.s32.totalorder %s188, %s189
      %p198 = scmp.eq.s32.totalorder %s47, 0
      %p199 = por %p197, %p198
      %p200 = scmp.ne.s32.totalorder %s188, %s189
      %p201 = scmp.eq.s32.totalorder %s48, 1
      %p202 = por %p200, %p201
      %p204 = scmp.ne.s32.totalorder %s189, %s203
      %p205 = scmp.eq.s32.totalorder %s48, 0
      %p206 = por %p204, %p205
      %s208 = sadd.s32 %s207, 1
      %p211 = scmp.eq.s32.totalorder %s42, 1
      %p212 = scmp.ne.s32.totalorder %s207, %s209
      %p213 = scmp.eq.s32.totalorder %s42, 0
      %p214 = por %p212, %p213
      %p215 = scmp.ne.s32.totalorder %s207, %s209
      %p216 = scmp.eq.s32.totalorder %s47, 1
      %p217 = por %p215, %p216
      %p218 = scmp.ne.s32.totalorder %s209, %s210
      %p219 = scmp.eq.s32.totalorder %s47, 0
      %p220 = por %p218, %p219
      %p221 = scmp.ne.s32.totalorder %s209, %s210
      %p222 = scmp.eq.s32.totalorder %s48, 1
      %p223 = por %p221, %p222
      %p225 = scmp.ne.s32.totalorder %s210, %s224
      %p226 = scmp.eq.s32.totalorder %s48, 0
      %p227 = por %p225, %p226
      %s229 = sadd.s32 %s228, 1
      %p232 = scmp.eq.s32.totalorder %s42, 1
      %p233 = scmp.ne.s32.totalorder %s228, %s230
      %p234 = scmp.eq.s32.totalorder %s42, 0
      %p235 = por %p233, %p234
      %p236 = scmp.ne.s32.totalorder %s228, %s230
      %p237 = scmp.eq.s32.totalorder %s47, 1
      %p238 = por %p236, %p237
      %p239 = scmp.ne.s32.totalorder %s230, %s231
      %p240 = scmp.eq.s32.totalorder %s47, 0
      %p241 = por %p239, %p240
      %p242 = scmp.ne.s32.totalorder %s230, %s231
      %p243 = scmp.eq.s32.totalorder %s48, 1
      %p244 = por %p242, %p243
      %p246 = scmp.ne.s32.totalorder %s231, %s245
      %p247 = scmp.eq.s32.totalorder %s48, 0
      %p248 = por %p246, %p247
      %s250 = sadd.s32 %s249, 1
      %p253 = scmp.eq.s32.totalorder %s42, 1
      %p254 = scmp.ne.s32.totalorder %s249, %s251
      %p255 = scmp.eq.s32.totalorder %s42, 0
      %p256 = por %p254, %p255
      %p257 = scmp.ne.s32.totalorder %s249, %s251
      %p258 = scmp.eq.s32.totalorder %s47, 1
      %p259 = por %p257, %p258
      %p260 = scmp.ne.s32.totalorder %s251, %s252
      %p261 = scmp.eq.s32.totalorder %s47, 0
      %p262 = por %p260, %p261
      %p263 = scmp.ne.s32.totalorder %s251, %s252
      %p264 = scmp.eq.s32.totalorder %s48, 1
      %p265 = por %p263, %p264
      %p267 = scmp.ne.s32.totalorder %s252, %s266
      %p268 = scmp.eq.s32.totalorder %s48, 0
      %p269 = por %p267, %p268
      %s271 = sadd.s32 %s270, 1
      %p274 = scmp.eq.s32.totalorder %s42, 1
      %p275 = scmp.ne.s32.totalorder %s270, %s272
      %p276 = scmp.eq.s32.totalorder %s42, 0
      %p277 = por %p275, %p276
      %p278 = scmp.ne.s32.totalorder %s270, %s272
      %p279 = scmp.eq.s32.totalorder %s47, 1
      %p280 = por %p278, %p279
      %p281 = scmp.ne.s32.totalorder %s272, %s273
      %p282 = scmp.eq.s32.totalorder %s47, 0
      %p283 = por %p281, %p282
      %p284 = scmp.ne.s32.totalorder %s272, %s273
      %p285 = scmp.eq.s32.totalorder %s48, 1
      %p286 = por %p284, %p285
      %p288 = scmp.ne.s32.totalorder %s273, %s287
      %p289 = scmp.eq.s32.totalorder %s48, 0
      %p290 = por %p288, %p289
      %s292 = sadd.s32 %s291, 1
      %p295 = scmp.eq.s32.totalorder %s42, 1
      %p296 = scmp.ne.s32.totalorder %s291, %s293
      %p297 = scmp.eq.s32.totalorder %s42, 0
      %p298 = por %p296, %p297
      %p299 = scmp.ne.s32.totalorder %s291, %s293
      %p300 = scmp.eq.s32.totalorder %s47, 1
      %p301 = por %p299, %p300
      %p302 = scmp.ne.s32.totalorder %s293, %s294
      %p303 = scmp.eq.s32.totalorder %s47, 0
      %p304 = por %p302, %p303
      %p305 = scmp.ne.s32.totalorder %s293, %s294
      %p306 = scmp.eq.s32.totalorder %s48, 1
      %p307 = por %p305, %p306
      %p309 = scmp.ne.s32.totalorder %s294, %s308
      %p310 = scmp.eq.s32.totalorder %s48, 0
      %p311 = por %p309, %p310
      %s313 = sadd.s32 %s312, 1
      %p316 = scmp.eq.s32.totalorder %s42, 1
      %p317 = scmp.ne.s32.totalorder %s312, %s314
      %p318 = scmp.eq.s32.totalorder %s42, 0
      %p319 = por %p317, %p318
      %p320 = scmp.ne.s32.totalorder %s312, %s314
      %p321 = scmp.eq.s32.totalorder %s47, 1
      %p322 = por %p320, %p321
      %p323 = scmp.ne.s32.totalorder %s314, %s315
      %p324 = scmp.eq.s32.totalorder %s47, 0
      %p325 = por %p323, %p324
      %p326 = scmp.ne.s32.totalorder %s314, %s315
      %p327 = scmp.eq.s32.totalorder %s48, 1
      %p328 = por %p326, %p327
      %p330 = scmp.ne.s32.totalorder %s315, %s329
      %p331 = scmp.eq.s32.totalorder %s48, 0
      %p332 = por %p330, %p331
      %s334 = sadd.s32 %s333, 1
      %p337 = scmp.eq.s32.totalorder %s42, 1
      %p338 = scmp.ne.s32.totalorder %s333, %s335
      %p339 = scmp.eq.s32.totalorder %s42, 0
      %p340 = por %p338, %p339
      %p341 = scmp.ne.s32.totalorder %s333, %s335
      %p342 = scmp.eq.s32.totalorder %s47, 1
      %p343 = por %p341, %p342
      %p344 = scmp.ne.s32.totalorder %s335, %s336
      %p345 = scmp.eq.s32.totalorder %s47, 0
      %p346 = por %p344, %p345
      %p347 = scmp.ne.s32.totalorder %s335, %s336
      %p348 = scmp.eq.s32.totalorder %s48, 1
      %p349 = por %p347, %p348
      %p351 = scmp.ne.s32.totalorder %s336, %s350
      %p352 = scmp.eq.s32.totalorder %s48, 0
      %p353 = por %p351, %p352
      %s355 = sadd.s32 %s354, 1
      %p358 = scmp.eq.s32.totalorder %s42, 1
      %p359 = scmp.ne.s32.totalorder %s354, %s356
      %p360 = scmp.eq.s32.totalorder %s42, 0
      %p361 = por %p359, %p360
      %p362 = scmp.ne.s32.totalorder %s354, %s356
      %p363 = scmp.eq.s32.totalorder %s47, 1
      %p364 = por %p362, %p363
      %p365 = scmp.ne.s32.totalorder %s356, %s357
      %p366 = scmp.eq.s32.totalorder %s47, 0
      %p367 = por %p365, %p366
      %p368 = scmp.ne.s32.totalorder %s356, %s357
      %p369 = scmp.eq.s32.totalorder %s48, 1
      %p370 = por %p368, %p369
      %p372 = scmp.ne.s32.totalorder %s357, %s371
      %p373 = scmp.eq.s32.totalorder %s48, 0
      %p374 = por %p372, %p373
      %s376 = sadd.s32 %s375, 1
      %p379 = scmp.eq.s32.totalorder %s42, 1
      %p380 = scmp.ne.s32.totalorder %s375, %s377
      %p381 = scmp.eq.s32.totalorder %s42, 0
      %p382 = por %p380, %p381
      %p383 = scmp.ne.s32.totalorder %s375, %s377
      %p384 = scmp.eq.s32.totalorder %s47, 1
      %p385 = por %p383, %p384
      %p386 = scmp.ne.s32.totalorder %s377, %s378
      %p387 = scmp.eq.s32.totalorder %s47, 0
      %p388 = por %p386, %p387
      %p389 = scmp.ne.s32.totalorder %s377, %s378
      %p390 = scmp.eq.s32.totalorder %s48, 1
      %p391 = por %p389, %p390
      %p393 = scmp.ne.s32.totalorder %s378, %s392
      %p394 = scmp.eq.s32.totalorder %s48, 0
      %p395 = por %p393, %p394
      %s397 = sadd.s32 %s396, 1
      %p400 = scmp.eq.s32.totalorder %s42, 1
      %p401 = scmp.ne.s32.totalorder %s396, %s398
      %p402 = scmp.eq.s32.totalorder %s42, 0
      %p403 = por %p401, %p402
      %p404 = scmp.ne.s32.totalorder %s396, %s398
      %p405 = scmp.eq.s32.totalorder %s47, 1
      %p406 = por %p404, %p405
      %p407 = scmp.ne.s32.totalorder %s398, %s399
      %p408 = scmp.eq.s32.totalorder %s47, 0
      %p409 = por %p407, %p408
      %p410 = scmp.ne.s32.totalorder %s398, %s399
      %p411 = scmp.eq.s32.totalorder %s48, 1
      %p412 = por %p410, %p411
      %p414 = scmp.ne.s32.totalorder %s399, %s413
      %p415 = scmp.eq.s32.totalorder %s48, 0
      %p416 = por %p414, %p415
      %s418 = sadd.s32 %s417, 1
      %p421 = scmp.eq.s32.totalorder %s42, 1
      %p422 = scmp.ne.s32.totalorder %s417, %s419
      %p423 = scmp.eq.s32.totalorder %s42, 0
      %p424 = por %p422, %p423
      %p425 = scmp.ne.s32.totalorder %s417, %s419
      %p426 = scmp.eq.s32.totalorder %s47, 1
      %p427 = por %p425, %p426
      %p428 = scmp.ne.s32.totalorder %s419, %s420
      %p429 = scmp.eq.s32.totalorder %s47, 0
      %p430 = por %p428, %p429
      %p431 = scmp.ne.s32.totalorder %s419, %s420
      %p432 = scmp.eq.s32.totalorder %s48, 1
      %p433 = por %p431, %p432
      %p435 = scmp.ne.s32.totalorder %s420, %s434
      %p436 = scmp.eq.s32.totalorder %s48, 0
      %p437 = por %p435, %p436
      %s439 = sadd.s32 %s438, 1
      %p442 = scmp.eq.s32.totalorder %s42, 1
      %p443 = scmp.ne.s32.totalorder %s438, %s440
      %p444 = scmp.eq.s32.totalorder %s42, 0
      %p445 = por %p443, %p444
      %p446 = scmp.ne.s32.totalorder %s438, %s440
      %p447 = scmp.eq.s32.totalorder %s47, 1
      %p448 = por %p446, %p447
      %p449 = scmp.ne.s32.totalorder %s440, %s441
      %p450 = scmp.eq.s32.totalorder %s47, 0
      %p451 = por %p449, %p450
      %p452 = scmp.ne.s32.totalorder %s440, %s441
      %p453 = scmp.eq.s32.totalorder %s48, 1
      %p454 = por %p452, %p453
      %p456 = scmp.ne.s32.totalorder %s441, %s455
      %p457 = scmp.eq.s32.totalorder %s48, 0
      %p458 = por %p456, %p457
      %s460 = sadd.s32 %s459, 1
      %p463 = scmp.eq.s32.totalorder %s42, 1
      %p464 = scmp.ne.s32.totalorder %s459, %s461
      %p465 = scmp.eq.s32.totalorder %s42, 0
      %p466 = por %p464, %p465
      %p467 = scmp.ne.s32.totalorder %s459, %s461
      %p468 = scmp.eq.s32.totalorder %s47, 1
      %p469 = por %p467, %p468
      %p470 = scmp.ne.s32.totalorder %s461, %s462
      %p471 = scmp.eq.s32.totalorder %s47, 0
      %p472 = por %p470, %p471
      %p473 = scmp.ne.s32.totalorder %s461, %s462
      %p474 = scmp.eq.s32.totalorder %s48, 1
      %p475 = por %p473, %p474
      %p477 = scmp.ne.s32.totalorder %s462, %s476
      %p478 = scmp.eq.s32.totalorder %s48, 0
      %p479 = por %p477, %p478
      %s481 = sadd.s32 %s480, 1
      %p484 = scmp.eq.s32.totalorder %s42, 1
      %p485 = scmp.ne.s32.totalorder %s480, %s482
      %p486 = scmp.eq.s32.totalorder %s42, 0
      %p487 = por %p485, %p486
      %p488 = scmp.ne.s32.totalorder %s480, %s482
      %p489 = scmp.eq.s32.totalorder %s47, 1
      %p490 = por %p488, %p489
      %p491 = scmp.ne.s32.totalorder %s482, %s483
      %p492 = scmp.eq.s32.totalorder %s47, 0
      %p493 = por %p491, %p492
      %p494 = scmp.ne.s32.totalorder %s482, %s483
      %p495 = scmp.eq.s32.totalorder %s48, 1
      %p496 = por %p494, %p495
      %p498 = scmp.ne.s32.totalorder %s483, %s497
      %p499 = scmp.eq.s32.totalorder %s48, 0
      %p500 = por %p498, %p499
      %s502 = sadd.s32 %s501, 1
      %p505 = scmp.eq.s32.totalorder %s42, 1
      %p506 = scmp.ne.s32.totalorder %s501, %s503
      %p507 = scmp.eq.s32.totalorder %s42, 0
      %p508 = por %p506, %p507
      %p509 = scmp.ne.s32.totalorder %s501, %s503
      %p510 = scmp.eq.s32.totalorder %s47, 1
      %p511 = por %p509, %p510
      %p512 = scmp.ne.s32.totalorder %s503, %s504
      %p513 = scmp.eq.s32.totalorder %s47, 0
      %p514 = por %p512, %p513
      %p515 = scmp.ne.s32.totalorder %s503, %s504
      %p516 = scmp.eq.s32.totalorder %s48, 1
      %p517 = por %p515, %p516
      %p519 = scmp.ne.s32.totalorder %s504, %s518
      %p520 = scmp.eq.s32.totalorder %s48, 0
      %p521 = por %p519, %p520
      %s522 = ssub.s32 %s42, %s49
      %p523 = scmp.eq.s32.totalorder %s522, 0
      %s525 = sadd.s32 %s524, 1
      %s526 = scalar_select %p523, %s524, %s525
      %p529 = pneg %p523
      %p530 = scmp.eq.s32.totalorder %s42, 1
      %p531 = por %p529, %p530
      %p532 = scmp.ne.s32.totalorder %s524, %s527
      %p533 = scmp.eq.s32.totalorder %s42, 0
      %p534 = por %p532, %p533
      %p535 = scmp.ne.s32.totalorder %s524, %s527
      %p536 = scmp.eq.s32.totalorder %s47, 1
      %p537 = por %p535, %p536
      %p538 = scmp.ne.s32.totalorder %s527, %s528
      %p539 = scmp.eq.s32.totalorder %s47, 0
      %p540 = por %p538, %p539
      %p541 = scmp.ne.s32.totalorder %s527, %s528
      %p542 = scmp.eq.s32.totalorder %s48, 1
      %p543 = por %p541, %p542
      %p545 = scmp.ne.s32.totalorder %s528, %s544
      %p546 = scmp.eq.s32.totalorder %s48, 0
      %p547 = por %p545, %p546
      %p548 = scmp.le.s32.totalorder 1, %s42
      %p549 = scmp.lt.s32.totalorder %s42, 3
      %p550 = pnand %p548, %p549
      %p551 = pneg %p550
      // Predicated region
      $region9: #{tpu_custom_call.1} parent=5 // pred_check
        _
      $region10: #{tpu_custom_call.1} parent=5 // pred_check_branch
        %553 = sbr.rel (%p550) target = $region12
      $region11: #{tpu_custom_call.1} parent=5 // pred_region
        %s554 = ssub.s32 %s42, 1
        // Predicated region
        $region13: #{tpu_custom_call.1} parent=11 // pred_check
          %p555 = pneg %p115
        $region14: #{tpu_custom_call.1} parent=11 // pred_check_branch
          %557 = sbr.rel (%p555) target = $region16
        $region15: #{tpu_custom_call.1} parent=11 // pred_region
          _
        $region16: #{tpu_custom_call.1} parent=11 // pred_fallthru
          _
        // Predicated region
        $region17: #{tpu_custom_call.1} parent=11 // pred_check
          %p558 = pneg %p136
        $region18: #{tpu_custom_call.1} parent=11 // pred_check_branch
          %560 = sbr.rel (%p558) target = $region20
        $region19: #{tpu_custom_call.1} parent=11 // pred_region
          _
        $region20: #{tpu_custom_call.1} parent=11 // pred_fallthru
          _
        // Predicated region
        $region21: #{tpu_custom_call.1} parent=11 // pred_check
          %p561 = pneg %p157
        $region22: #{tpu_custom_call.1} parent=11 // pred_check_branch
          %563 = sbr.rel (%p561) target = $region24
        $region23: #{tpu_custom_call.1} parent=11 // pred_region
          %565 = vsyncadd [#allocation6], 0
          %s566 = sshll.u32 %s4, 4
          %s567 = int_to_ptr.hbm [resolvable:$true] %s566
          %s568 = sshll.u32 [#allocation7], 4
          %s569 = int_to_ptr.vmem [resolvable:$true] %s568
          %574 = dma.hbm_to_vmem [thread:$0]  %s567, 256, %s569, [#allocation6], 128, 128, 8
        $region24: #{tpu_custom_call.1} parent=11 // pred_fallthru
          _
        // Predicated region
        $region25: #{tpu_custom_call.1} parent=11 // pred_check
          %p575 = pneg %p178
        $region26: #{tpu_custom_call.1} parent=11 // pred_check_branch
          %577 = sbr.rel (%p575) target = $region28
        $region27: #{tpu_custom_call.1} parent=11 // pred_region
          %579 = vsyncadd [#allocation9], 0
          %s581 = sshll.u32 %s5, 4
          %s582 = int_to_ptr.hbm [resolvable:$true] %s581
          %s583 = sshll.u32 [#allocation8], 4
          %s584 = int_to_ptr.vmem [resolvable:$true] %s583
          %586 = dma.hbm_to_vmem [thread:$0]  %s582, 16, %s584, [#allocation9]
        $region28: #{tpu_custom_call.1} parent=11 // pred_fallthru
          _
        // Predicated region
        $region29: #{tpu_custom_call.1} parent=11 // pred_check
          %p587 = pneg %p199
        $region30: #{tpu_custom_call.1} parent=11 // pred_check_branch
          %589 = sbr.rel (%p587) target = $region32
        $region31: #{tpu_custom_call.1} parent=11 // pred_region
          _
        $region32: #{tpu_custom_call.1} parent=11 // pred_fallthru
          _
        // Predicated region
        $region33: #{tpu_custom_call.1} parent=11 // pred_check
          %p590 = pneg %p220
        $region34: #{tpu_custom_call.1} parent=11 // pred_check_branch
          %592 = sbr.rel (%p590) target = $region36
        $region35: #{tpu_custom_call.1} parent=11 // pred_region
          %594 = vsyncadd [#allocation9], 0
          %s596 = sshll.u32 %s7, 4
          %s597 = int_to_ptr.hbm [resolvable:$true] %s596
          %s598 = sshll.u32 [#allocation10], 4
          %s599 = int_to_ptr.vmem [resolvable:$true] %s598
          %601 = dma.hbm_to_vmem [thread:$0]  %s597, 16, %s599, [#allocation9]
        $region36: #{tpu_custom_call.1} parent=11 // pred_fallthru
          _
        // Predicated region
        $region37: #{tpu_custom_call.1} parent=11 // pred_check
          %p602 = pneg %p241
        $region38: #{tpu_custom_call.1} parent=11 // pred_check_branch
          %604 = sbr.rel (%p602) target = $region40
        $region39: #{tpu_custom_call.1} parent=11 // pred_region
          %606 = vsyncadd [#allocation12], 0
          %s608 = sshll.u32 %s8, 4
          %s609 = int_to_ptr.hbm [resolvable:$true] %s608
          %s610 = sshll.u32 [#allocation11], 4
          %s611 = int_to_ptr.vmem [resolvable:$true] %s610
          %613 = dma.hbm_to_vmem [thread:$0]  %s609, 128, %s611, [#allocation12]
        $region40: #{tpu_custom_call.1} parent=11 // pred_fallthru
          _
        // Predicated region
        $region41: #{tpu_custom_call.1} parent=11 // pred_check
          %p614 = pneg %p262
        $region42: #{tpu_custom_call.1} parent=11 // pred_check_branch
          %616 = sbr.rel (%p614) target = $region44
        $region43: #{tpu_custom_call.1} parent=11 // pred_region
          %618 = vsyncadd [#allocation12], 0
          %s620 = sshll.u32 %s9, 4
          %s621 = int_to_ptr.hbm [resolvable:$true] %s620
          %s622 = sshll.u32 [#allocation13], 4
          %s623 = int_to_ptr.vmem [resolvable:$true] %s622
          %625 = dma.hbm_to_vmem [thread:$0]  %s621, 128, %s623, [#allocation12]
        $region44: #{tpu_custom_call.1} parent=11 // pred_fallthru
          _
        // Predicated region
        $region45: #{tpu_custom_call.1} parent=11 // pred_check
          %p626 = pneg %p283
        $region46: #{tpu_custom_call.1} parent=11 // pred_check_branch
          %628 = sbr.rel (%p626) target = $region48
        $region47: #{tpu_custom_call.1} parent=11 // pred_region
          _
        $region48: #{tpu_custom_call.1} parent=11 // pred_fallthru
          _
        // Predicated region
        $region49: #{tpu_custom_call.1} parent=11 // pred_check
          %p629 = pneg %p304
        $region50: #{tpu_custom_call.1} parent=11 // pred_check_branch
          %631 = sbr.rel (%p629) target = $region52
        $region51: #{tpu_custom_call.1} parent=11 // pred_region
          %633 = vsyncadd [#allocation15], 0
          %s635 = sshll.u32 %s11, 4
          %s636 = int_to_ptr.hbm [resolvable:$true] %s635
          %s637 = sshll.u32 [#allocation14], 4
          %s638 = int_to_ptr.vmem [resolvable:$true] %s637
          %640 = dma.hbm_to_vmem [thread:$0]  %s636, 16, %s638, [#allocation15]
        $region52: #{tpu_custom_call.1} parent=11 // pred_fallthru
          _
        // Predicated region
        $region53: #{tpu_custom_call.1} parent=11 // pred_check
          %p641 = pneg %p325
        $region54: #{tpu_custom_call.1} parent=11 // pred_check_branch
          %643 = sbr.rel (%p641) target = $region56
        $region55: #{tpu_custom_call.1} parent=11 // pred_region
          _
        $region56: #{tpu_custom_call.1} parent=11 // pred_fallthru
          _
        // Predicated region
        $region57: #{tpu_custom_call.1} parent=11 // pred_check
          %p644 = pneg %p346
        $region58: #{tpu_custom_call.1} parent=11 // pred_check_branch
          %646 = sbr.rel (%p644) target = $region60
        $region59: #{tpu_custom_call.1} parent=11 // pred_region
          %648 = vsyncadd [#allocation15], 0
          %s650 = sshll.u32 %s13, 4
          %s651 = int_to_ptr.hbm [resolvable:$true] %s650
          %s652 = sshll.u32 [#allocation16], 4
          %s653 = int_to_ptr.vmem [resolvable:$true] %s652
          %655 = dma.hbm_to_vmem [thread:$0]  %s651, 16, %s653, [#allocation15]
        $region60: #{tpu_custom_call.1} parent=11 // pred_fallthru
          _
        // Predicated region
        $region61: #{tpu_custom_call.1} parent=11 // pred_check
          %p656 = pneg %p367
        $region62: #{tpu_custom_call.1} parent=11 // pred_check_branch
          %658 = sbr.rel (%p656) target = $region64
        $region63: #{tpu_custom_call.1} parent=11 // pred_region
          _
        $region64: #{tpu_custom_call.1} parent=11 // pred_fallthru
          _
        // Predicated region
        $region65: #{tpu_custom_call.1} parent=11 // pred_check
          %p659 = pneg %p388
        $region66: #{tpu_custom_call.1} parent=11 // pred_check_branch
          %661 = sbr.rel (%p659) target = $region68
        $region67: #{tpu_custom_call.1} parent=11 // pred_region
          %663 = vsyncadd [#allocation18], 0
          %s665 = sshll.u32 %s15, 4
          %s666 = int_to_ptr.hbm [resolvable:$true] %s665
          %s667 = sshll.u32 [#allocation17], 4
          %s668 = int_to_ptr.vmem [resolvable:$true] %s667
          %670 = dma.hbm_to_vmem [thread:$0]  %s666, 128, %s668, [#allocation18]
        $region68: #{tpu_custom_call.1} parent=11 // pred_fallthru
          _
        // Predicated region
        $region69: #{tpu_custom_call.1} parent=11 // pred_check
          %p671 = pneg %p409
        $region70: #{tpu_custom_call.1} parent=11 // pred_check_branch
          %673 = sbr.rel (%p671) target = $region72
        $region71: #{tpu_custom_call.1} parent=11 // pred_region
          _
        $region72: #{tpu_custom_call.1} parent=11 // pred_fallthru
          _
        // Predicated region
        $region73: #{tpu_custom_call.1} parent=11 // pred_check
          %p674 = pneg %p430
        $region74: #{tpu_custom_call.1} parent=11 // pred_check_branch
          %676 = sbr.rel (%p674) target = $region76
        $region75: #{tpu_custom_call.1} parent=11 // pred_region
          %678 = vsyncadd [#allocation18], 0
          %s680 = sshll.u32 %s17, 4
          %s681 = int_to_ptr.hbm [resolvable:$true] %s680
          %s682 = sshll.u32 [#allocation19], 4
          %s683 = int_to_ptr.vmem [resolvable:$true] %s682
          %685 = dma.hbm_to_vmem [thread:$0]  %s681, 16, %s683, [#allocation18]
        $region76: #{tpu_custom_call.1} parent=11 // pred_fallthru
          _
        // Predicated region
        $region77: #{tpu_custom_call.1} parent=11 // pred_check
          %p686 = pneg %p451
        $region78: #{tpu_custom_call.1} parent=11 // pred_check_branch
          %688 = sbr.rel (%p686) target = $region80
        $region79: #{tpu_custom_call.1} parent=11 // pred_region
          _
        $region80: #{tpu_custom_call.1} parent=11 // pred_fallthru
          _
        // Predicated region
        $region81: #{tpu_custom_call.1} parent=11 // pred_check
          %p689 = pneg %p472
        $region82: #{tpu_custom_call.1} parent=11 // pred_check_branch
          %691 = sbr.rel (%p689) target = $region84
        $region83: #{tpu_custom_call.1} parent=11 // pred_region
          %693 = vsyncadd [#allocation21], 0
          %s695 = sshll.u32 %s19, 4
          %s696 = int_to_ptr.hbm [resolvable:$true] %s695
          %s697 = sshll.u32 [#allocation20], 4
          %s698 = int_to_ptr.vmem [resolvable:$true] %s697
          %700 = dma.hbm_to_vmem [thread:$0]  %s696, 16, %s698, [#allocation21]
        $region84: #{tpu_custom_call.1} parent=11 // pred_fallthru
          _
        // Predicated region
        $region85: #{tpu_custom_call.1} parent=11 // pred_check
          %p701 = pneg %p493
        $region86: #{tpu_custom_call.1} parent=11 // pred_check_branch
          %703 = sbr.rel (%p701) target = $region88
        $region87: #{tpu_custom_call.1} parent=11 // pred_region
          _
        $region88: #{tpu_custom_call.1} parent=11 // pred_fallthru
          _
        // Predicated region
        $region89: #{tpu_custom_call.1} parent=11 // pred_check
          %p704 = pneg %p514
        $region90: #{tpu_custom_call.1} parent=11 // pred_check_branch
          %706 = sbr.rel (%p704) target = $region92
        $region91: #{tpu_custom_call.1} parent=11 // pred_region
          %708 = vsyncadd [#allocation21], 0
          %s710 = sshll.u32 %s21, 4
          %s711 = int_to_ptr.hbm [resolvable:$true] %s710
          %s712 = sshll.u32 [#allocation22], 4
          %s713 = int_to_ptr.vmem [resolvable:$true] %s712
          %715 = dma.hbm_to_vmem [thread:$0]  %s711, 128, %s713, [#allocation21]
        $region92: #{tpu_custom_call.1} parent=11 // pred_fallthru
          _
      $region12: #{tpu_custom_call.1} parent=5 // pred_fallthru
        _
      %p716 = scmp.lt.s32.totalorder %s42, 2
      // Predicated region
      $region93: #{tpu_custom_call.1} parent=5 // pred_check
        %p717 = pneg %p716
      $region94: #{tpu_custom_call.1} parent=5 // pred_check_branch
        %719 = sbr.rel (%p717) target = $region96
      $region95: #{tpu_custom_call.1} parent=5 // pred_region
        // Predicated region
        $region97: #{tpu_custom_call.1} parent=95 // pred_check
          %p720 = pneg %p62
        $region98: #{tpu_custom_call.1} parent=95 // pred_check_branch
          %722 = sbr.rel (%p720) target = $region100
        $region99: #{tpu_custom_call.1} parent=95 // pred_region
          %s723 = sand.u32 %s52, 1
          %s724 = scalar_lea.sflag [#allocation3], %s723
          %s725 = sand.u32 %s52, 1
          %s726 = smul.addr %s725, 8
          %s727 = scalar_lea.vmem [#allocation2], %s726
          %729 = vsyncadd %s724, 0
          %s730 = smul.addr %s42, 8
          %s731 = scalar_lea.hbm %s0, %s730
          %s733 = sshll.u32 %s731, 4
          %s734 = int_to_ptr.hbm [resolvable:$true] %s733
          %s735 = sshll.u32 %s727, 4
          %s736 = int_to_ptr.vmem [resolvable:$true] %s735
          %738 = dma.hbm_to_vmem [thread:$0]  %s734, 128, %s736, %s724
        $region100: #{tpu_custom_call.1} parent=95 // pred_fallthru
          _
        // Predicated region
        $region101: #{tpu_custom_call.1} parent=95 // pred_check
          %p739 = pneg %p88
        $region102: #{tpu_custom_call.1} parent=95 // pred_check_branch
          %741 = sbr.rel (%p739) target = $region104
        $region103: #{tpu_custom_call.1} parent=95 // pred_region
          %s742 = sand.u32 %s42, 1
          %s743 = scalar_lea.sflag [#allocation6], %s742
          %s744 = sand.u32 %s78, 1
          %s745 = smul.addr %s744, 8
          %s746 = scalar_lea.vmem [#allocation5], %s745
          %748 = vsyncadd %s743, 0
          %s749 = smul.addr %s42, 8
          %s750 = scalar_lea.hbm %s1, %s749
          %s752 = sshll.u32 %s750, 4
          %s753 = int_to_ptr.hbm [resolvable:$true] %s752
          %s754 = sshll.u32 %s746, 4
          %s755 = int_to_ptr.vmem [resolvable:$true] %s754
          %757 = dma.hbm_to_vmem [thread:$0]  %s753, 128, %s755, %s743
        $region104: #{tpu_custom_call.1} parent=95 // pred_fallthru
          _
      $region96: #{tpu_custom_call.1} parent=5 // pred_fallthru
        _
      %p758 = scmp.le.s32.totalorder 1, %s42
      %p759 = scmp.lt.s32.totalorder %s42, 3
      %p760 = pnand %p758, %p759
      %p761 = pneg %p760
      // Predicated region
      $region105: #{tpu_custom_call.1} parent=5 // pred_check
        _
      $region106: #{tpu_custom_call.1} parent=5 // pred_check_branch
        %763 = sbr.rel (%p760) target = $region108
      $region107: #{tpu_custom_call.1} parent=5 // pred_region
        %s764 = ssub.s32 %s42, 1
        %s765 = sand.u32 %s55, 1
        %s766 = scalar_lea.sflag [#allocation3], %s765
        %s767 = sand.u32 %s55, 1
        %s768 = smul.addr %s767, 8
        %s769 = scalar_lea.vmem [#allocation2], %s768
        // Predicated region
        $region109: #{tpu_custom_call.1} parent=107 // pred_check
          %p770 = pneg %p68
        $region110: #{tpu_custom_call.1} parent=107 // pred_check_branch
          %772 = sbr.rel (%p770) target = $region112
        $region111: #{tpu_custom_call.1} parent=107 // pred_region
          %774 = dma.done %s766, 128
        $region112: #{tpu_custom_call.1} parent=107 // pred_fallthru
          _
        %s775 = sand.u32 %s47, 1
        %s776 = scalar_lea.sflag [#allocation6], %s775
        %s777 = sand.u32 %s81, 1
        %s778 = smul.addr %s777, 8
        %s779 = scalar_lea.vmem [#allocation5], %s778
        // Predicated region
        $region113: #{tpu_custom_call.1} parent=107 // pred_check
          %p780 = pneg %p94
        $region114: #{tpu_custom_call.1} parent=107 // pred_check_branch
          %782 = sbr.rel (%p780) target = $region116
        $region115: #{tpu_custom_call.1} parent=107 // pred_region
          %784 = dma.done %s776, 128
        $region116: #{tpu_custom_call.1} parent=107 // pred_fallthru
          _
        // Predicated region
        $region117: #{tpu_custom_call.1} parent=107 // pred_check
          %p785 = pneg %p157
        $region118: #{tpu_custom_call.1} parent=107 // pred_check_branch
          %787 = sbr.rel (%p785) target = $region120
        $region119: #{tpu_custom_call.1} parent=107 // pred_region
          %789 = dma.done [#allocation6], 256
        $region120: #{tpu_custom_call.1} parent=107 // pred_fallthru
          _
        // Predicated region
        $region121: #{tpu_custom_call.1} parent=107 // pred_check
          %p790 = pneg %p178
        $region122: #{tpu_custom_call.1} parent=107 // pred_check_branch
          %792 = sbr.rel (%p790) target = $region124
        $region123: #{tpu_custom_call.1} parent=107 // pred_region
          %794 = dma.done [#allocation9], 16
        $region124: #{tpu_custom_call.1} parent=107 // pred_fallthru
          _
        // Predicated region
        $region125: #{tpu_custom_call.1} parent=107 // pred_check
          %p795 = pneg %p220
        $region126: #{tpu_custom_call.1} parent=107 // pred_check_branch
          %797 = sbr.rel (%p795) target = $region128
        $region127: #{tpu_custom_call.1} parent=107 // pred_region
          %799 = dma.done [#allocation9], 16
        $region128: #{tpu_custom_call.1} parent=107 // pred_fallthru
          _
        // Predicated region
        $region129: #{tpu_custom_call.1} parent=107 // pred_check
          %p800 = pneg %p241
        $region130: #{tpu_custom_call.1} parent=107 // pred_check_branch
          %802 = sbr.rel (%p800) target = $region132
        $region131: #{tpu_custom_call.1} parent=107 // pred_region
          %804 = dma.done [#allocation12], 128
        $region132: #{tpu_custom_call.1} parent=107 // pred_fallthru
          _
        // Predicated region
        $region133: #{tpu_custom_call.1} parent=107 // pred_check
          %p805 = pneg %p262
        $region134: #{tpu_custom_call.1} parent=107 // pred_check_branch
          %807 = sbr.rel (%p805) target = $region136
        $region135: #{tpu_custom_call.1} parent=107 // pred_region
          %809 = dma.done [#allocation12], 128
        $region136: #{tpu_custom_call.1} parent=107 // pred_fallthru
          _
        // Predicated region
        $region137: #{tpu_custom_call.1} parent=107 // pred_check
          %p810 = pneg %p304
        $region138: #{tpu_custom_call.1} parent=107 // pred_check_branch
          %812 = sbr.rel (%p810) target = $region140
        $region139: #{tpu_custom_call.1} parent=107 // pred_region
          %814 = dma.done [#allocation15], 16
        $region140: #{tpu_custom_call.1} parent=107 // pred_fallthru
          _
        // Predicated region
        $region141: #{tpu_custom_call.1} parent=107 // pred_check
          %p815 = pneg %p346
        $region142: #{tpu_custom_call.1} parent=107 // pred_check_branch
          %817 = sbr.rel (%p815) target = $region144
        $region143: #{tpu_custom_call.1} parent=107 // pred_region
          %819 = dma.done [#allocation15], 16
        $region144: #{tpu_custom_call.1} parent=107 // pred_fallthru
          _
        // Predicated region
        $region145: #{tpu_custom_call.1} parent=107 // pred_check
          %p820 = pneg %p388
        $region146: #{tpu_custom_call.1} parent=107 // pred_check_branch
          %822 = sbr.rel (%p820) target = $region148
        $region147: #{tpu_custom_call.1} parent=107 // pred_region
          %824 = dma.done [#allocation18], 128
        $region148: #{tpu_custom_call.1} parent=107 // pred_fallthru
          _
        // Predicated region
        $region149: #{tpu_custom_call.1} parent=107 // pred_check
          %p825 = pneg %p430
        $region150: #{tpu_custom_call.1} parent=107 // pred_check_branch
          %827 = sbr.rel (%p825) target = $region152
        $region151: #{tpu_custom_call.1} parent=107 // pred_region
          %829 = dma.done [#allocation18], 16
        $region152: #{tpu_custom_call.1} parent=107 // pred_fallthru
          _
        // Predicated region
        $region153: #{tpu_custom_call.1} parent=107 // pred_check
          %p830 = pneg %p472
        $region154: #{tpu_custom_call.1} parent=107 // pred_check_branch
          %832 = sbr.rel (%p830) target = $region156
        $region155: #{tpu_custom_call.1} parent=107 // pred_region
          %834 = dma.done [#allocation21], 16
        $region156: #{tpu_custom_call.1} parent=107 // pred_fallthru
          _
        // Predicated region
        $region157: #{tpu_custom_call.1} parent=107 // pred_check
          %p835 = pneg %p514
        $region158: #{tpu_custom_call.1} parent=107 // pred_check_branch
          %837 = sbr.rel (%p835) target = $region160
        $region159: #{tpu_custom_call.1} parent=107 // pred_region
          %839 = dma.done [#allocation21], 128
        $region160: #{tpu_custom_call.1} parent=107 // pred_fallthru
          _
        %s840 = sand.u32 %s55, 1
        %s841 = scalar_lea.sflag [#allocation3], %s840
        %s842 = sand.u32 %s55, 1
        %s843 = smul.addr %s842, 8
        %s844 = scalar_lea.vmem [#allocation2], %s843
        %p845 = pneg %p68
        %p846 = pneg %p65
        %s847 = sand.u32 %s47, 1
        %s848 = scalar_lea.sflag [#allocation6], %s847
        %s849 = sand.u32 %s81, 1
        %s850 = smul.addr %s849, 8
        %s851 = scalar_lea.vmem [#allocation5], %s850
        %p852 = pneg %p94
        %p853 = pneg %p91
        %p854 = pneg %p115
        %p855 = pneg %p112
        %p856 = pneg %p136
        %p857 = pneg %p133
        %p858 = pneg %p157
        %p859 = pneg %p154
        %p860 = pneg %p178
        %p861 = pneg %p175
        %p862 = pneg %p199
        %p863 = pneg %p196
        %p864 = pneg %p220
        %p865 = pneg %p217
        %p866 = pneg %p241
        %p867 = pneg %p238
        %p868 = pneg %p262
        %p869 = pneg %p259
        %p870 = pneg %p283
        %p871 = pneg %p280
        %p872 = pneg %p304
        %p873 = pneg %p301
        %p874 = pneg %p325
        %p875 = pneg %p322
        %p876 = pneg %p346
        %p877 = pneg %p343
        %p878 = pneg %p367
        %p879 = pneg %p364
        %p880 = pneg %p388
        %p881 = pneg %p385
        %p882 = pneg %p409
        %p883 = pneg %p406
        %p884 = pneg %p430
        %p885 = pneg %p427
        %p886 = pneg %p451
        %p887 = pneg %p448
        %p888 = pneg %p472
        %p889 = pneg %p469
        %p890 = pneg %p493
        %p891 = pneg %p490
        %p892 = pneg %p514
        %p893 = pneg %p511
        %p894 = pneg %p540
        %p895 = pneg %p537
        %s896 = sand.u32 %s527, 1
        %s897 = scalar_lea.sflag [#allocation4], %s896
        %s898 = sand.u32 %s527, 1
        %s899 = smul.addr %s898, 8
        %s900 = scalar_lea.vmem [#allocation23], %s899
        %v901 = vld [vmem:[%s769] sm:$0xff]
        %v902 = vld [vmem:[%s779] sm:$0xff]
        %v903 = vld [vmem:[%s2] sm:$0xff]
        %v904 = vld [vmem:[%s2 + $0x8] sm:$0xff]
        %v905 = vld [vmem:[%s2 + $0x10] sm:$0xff]
        %v906 = vld [vmem:[%s2 + $0x18] sm:$0xff]
        %v907 = vld [vmem:[%s3] sm:$0x1]
        %v909 = vperm.slane %v907, 0
        %vm911 = vcmask 261120
        %v913 = vsel %vm911, %v901, 0
        %915 = vmatpush.msra.mxu0 0.0
        %916 = vmatpush.msra.mxu0 0.0
        %917 = vmatpush.msra.mxu0 0.0
        %918 = vmatpush.msra.mxu0 0.0
        %919 = vmatpush.msra.mxu0 0.0
        %920 = vmatpush.msra.mxu0 0.0
        %921 = vmatpush.msra.mxu0 0.0
        %922 = vmatpush.msra.mxu0 0.0
        %923 = vmatpush.msra.mxu0 0.0
        %924 = vmatpush.msra.mxu0 0.0
        %925 = vmatpush.msra.mxu0 0.0
        %926 = vmatpush.msra.mxu0 0.0
        %927 = vmatpush.msra.mxu0 %v906
        %928 = vmatpush.msra.mxu0 %v905
        %929 = vmatpush.msra.mxu0 %v904
        %930 = vmatpush.msra.mxu0 %v903
        %931 = vmatmul.f32.gmra.mxu0 %v913
        %v932 = vpop.f32.mrf.mxu0
        %v933 = vadd.f32 %v909, %v932
        %934 = vdwg.mxu0
        %v935 = vld [vmem:[#allocation7] sm:$0xff]
        %v936 = vld [vmem:[#allocation7 + $0x8] sm:$0xff]
        %v937 = vld [vmem:[#allocation8] sm:$0x1]
        %v939 = vperm.slane %v937, 0
        %vm941 = vcmask 130048
        %v943 = vsel %vm941, %v902, 0
        %945 = vmatpush.msra.mxu0 0.0
        %946 = vmatpush.msra.mxu0 0.0
        %947 = vmatpush.msra.mxu0 0.0
        %948 = vmatpush.msra.mxu0 0.0
        %949 = vmatpush.msra.mxu0 0.0
        %950 = vmatpush.msra.mxu0 0.0
        %951 = vmatpush.msra.mxu0 0.0
        %952 = vmatpush.msra.mxu0 0.0
        %953 = vmatpush.msra.mxu0 0.0
        %954 = vmatpush.msra.mxu0 0.0
        %955 = vmatpush.msra.mxu0 0.0
        %956 = vmatpush.msra.mxu0 0.0
        %957 = vmatpush.msra.mxu0 0.0
        %958 = vmatpush.msra.mxu0 0.0
        %959 = vmatpush.msra.mxu0 %v936
        %960 = vmatpush.msra.mxu0 %v935
        %961 = vmatmul.f32.gmra.mxu0 %v943
        %v962 = vpop.f32.mrf.mxu0
        %v963 = vadd.f32 %v939, %v962
        %964 = vdwg.mxu0
        %v965 = vld [vmem:[%s6] sm:$0xff]
        %v966 = vld [vmem:[%s6 + $0x8] sm:$0xff]
        %v967 = vld [vmem:[%s6 + $0x10] sm:$0xff]
        %v968 = vld [vmem:[%s6 + $0x18] sm:$0xff]
        %v969 = vld [vmem:[#allocation10] sm:$0x1]
        %v970 = vld [vmem:[#allocation11] sm:$0xff]
        %v971 = vld [vmem:[#allocation13] sm:$0xff]
        %973 = vrot.lane.b32.xlu0 %v933, 120
        %v974 = vpop.permute.xlu0 %973
        %976 = vrot.lane.b32.xlu0 %v933, 112
        %v977 = vpop.permute.xlu0 %976
        %979 = vrot.lane.b32.xlu0 %v933, 104
        %v980 = vpop.permute.xlu0 %979
        %v982 = vmul.f32 %v933, 0.125
        %v983 = vmul.f32 %v974, 0.125
        %v984 = vmul.f32 %v977, 0.125
        %v985 = vmul.f32 %v980, 0.125
        %987 = vrot.lane.b32.xlu0 %v963, 120
        %v988 = vpop.permute.xlu0 %987
        %989 = vrot.lane.b32.xlu0 %v963, 112
        %v990 = vpop.permute.xlu0 %989
        %991 = vrot.lane.b32.xlu0 %v963, 104
        %v992 = vpop.permute.xlu0 %991
        %vm993 = vcmask 64512
        %v995 = vsel %vm993, %v982, 0
        %v997 = vsel %vm993, %v963, 0
        %999 = vmatpush.xpose.msra.mxu0 0.0
        %1000 = vmatpush.xpose.msra.mxu0 0.0
        %1001 = vmatpush.xpose.msra.mxu0 0.0
        %1002 = vmatpush.xpose.msra.mxu0 0.0
        %1003 = vmatpush.xpose.msra.mxu0 0.0
        %1004 = vmatpush.xpose.msra.mxu0 0.0
        %1005 = vmatpush.xpose.msra.mxu0 0.0
        %1006 = vmatpush.xpose.msra.mxu0 0.0
        %1007 = vmatpush.xpose.msra.mxu0 0.0
        %1008 = vmatpush.xpose.msra.mxu0 0.0
        %1009 = vmatpush.xpose.msra.mxu0 0.0
        %1010 = vmatpush.xpose.msra.mxu0 0.0
        %1011 = vmatpush.xpose.msra.mxu0 0.0
        %1012 = vmatpush.xpose.msra.mxu0 0.0
        %1013 = vmatpush.xpose.msra.mxu0 0.0
        %1014 = vmatpush.xpose.msra.mxu0 %v997
        %1015 = vmatmul.f32.gmra.mxu0 %v995
        %v1016 = vpop.f32.mrf.mxu0
        %v1017 = vadd.f32 0.0, %v1016
        %1018 = vdwg.mxu0
        %v1020 = vsel %vm993, %v983, 0
        %v1022 = vsel %vm993, %v988, 0
        %1024 = vmatpush.xpose.msra.mxu0 0.0
        %1025 = vmatpush.xpose.msra.mxu0 0.0
        %1026 = vmatpush.xpose.msra.mxu0 0.0
        %1027 = vmatpush.xpose.msra.mxu0 0.0
        %1028 = vmatpush.xpose.msra.mxu0 0.0
        %1029 = vmatpush.xpose.msra.mxu0 0.0
        %1030 = vmatpush.xpose.msra.mxu0 0.0
        %1031 = vmatpush.xpose.msra.mxu0 0.0
        %1032 = vmatpush.xpose.msra.mxu0 0.0
        %1033 = vmatpush.xpose.msra.mxu0 0.0
        %1034 = vmatpush.xpose.msra.mxu0 0.0
        %1035 = vmatpush.xpose.msra.mxu0 0.0
        %1036 = vmatpush.xpose.msra.mxu0 0.0
        %1037 = vmatpush.xpose.msra.mxu0 0.0
        %1038 = vmatpush.xpose.msra.mxu0 0.0
        %1039 = vmatpush.xpose.msra.mxu0 %v1022
        %1040 = vmatmul.f32.gmra.mxu0 %v1020
        %v1041 = vpop.f32.mrf.mxu0
        %v1042 = vadd.f32 0.0, %v1041
        %1043 = vdwg.mxu0
        %v1045 = vsel %vm993, %v984, 0
        %v1047 = vsel %vm993, %v990, 0
        %1049 = vmatpush.xpose.msra.mxu0 0.0
        %1050 = vmatpush.xpose.msra.mxu0 0.0
        %1051 = vmatpush.xpose.msra.mxu0 0.0
        %1052 = vmatpush.xpose.msra.mxu0 0.0
        %1053 = vmatpush.xpose.msra.mxu0 0.0
        %1054 = vmatpush.xpose.msra.mxu0 0.0
        %1055 = vmatpush.xpose.msra.mxu0 0.0
        %1056 = vmatpush.xpose.msra.mxu0 0.0
        %1057 = vmatpush.xpose.msra.mxu0 0.0
        %1058 = vmatpush.xpose.msra.mxu0 0.0
        %1059 = vmatpush.xpose.msra.mxu0 0.0
        %1060 = vmatpush.xpose.msra.mxu0 0.0
        %1061 = vmatpush.xpose.msra.mxu0 0.0
        %1062 = vmatpush.xpose.msra.mxu0 0.0
        %1063 = vmatpush.xpose.msra.mxu0 0.0
        %1064 = vmatpush.xpose.msra.mxu0 %v1047
        %1065 = vmatmul.f32.gmra.mxu0 %v1045
        %v1066 = vpop.f32.mrf.mxu0
        %v1067 = vadd.f32 0.0, %v1066
        %1068 = vdwg.mxu0
        %v1070 = vsel %vm993, %v985, 0
        %v1072 = vsel %vm993, %v992, 0
        %1074 = vmatpush.xpose.msra.mxu0 0.0
        %1075 = vmatpush.xpose.msra.mxu0 0.0
        %1076 = vmatpush.xpose.msra.mxu0 0.0
        %1077 = vmatpush.xpose.msra.mxu0 0.0
        %1078 = vmatpush.xpose.msra.mxu0 0.0
        %1079 = vmatpush.xpose.msra.mxu0 0.0
        %1080 = vmatpush.xpose.msra.mxu0 0.0
        %1081 = vmatpush.xpose.msra.mxu0 0.0
        %1082 = vmatpush.xpose.msra.mxu0 0.0
        %1083 = vmatpush.xpose.msra.mxu0 0.0
        %1084 = vmatpush.xpose.msra.mxu0 0.0
        %1085 = vmatpush.xpose.msra.mxu0 0.0
        %1086 = vmatpush.xpose.msra.mxu0 0.0
        %1087 = vmatpush.xpose.msra.mxu0 0.0
        %1088 = vmatpush.xpose.msra.mxu0 0.0
        %1089 = vmatpush.xpose.msra.mxu0 %v1072
        %1090 = vmatmul.f32.gmra.mxu0 %v1070
        %v1091 = vpop.f32.mrf.mxu0
        %v1092 = vadd.f32 0.0, %v1091
        %1093 = vdwg.mxu0
        %v1094 = vsel %vm993, %v1017, -inf
        %1095 = vmax.xlane.f32.xlu0 %v1094
        %v1096 = vpop.xlane.xlu0 %1095
        %v1097 = vsel %vm993, %v1042, -inf
        %1098 = vmax.xlane.f32.xlu0 %v1097
        %v1099 = vpop.xlane.xlu0 %1098
        %v1100 = vsel %vm993, %v1067, -inf
        %1101 = vmax.xlane.f32.xlu0 %v1100
        %v1102 = vpop.xlane.xlu0 %1101
        %v1103 = vsel %vm993, %v1092, -inf
        %1104 = vmax.xlane.f32.xlu0 %v1103
        %v1105 = vpop.xlane.xlu0 %1104
        %v1106 = vsub.f32 %v1017, %v1096
        %v1107 = vsub.f32 %v1042, %v1099
        %v1108 = vsub.f32 %v1067, %v1102
        %v1109 = vsub.f32 %v1092, %v1105
        %v1110 = vmul.f32 %v1106, 1.442695
        %v1111 = vpow.pop %v1110
        %v1112 = vmul.f32 %v1107, 1.442695
        %v1113 = vpow.pop %v1112
        %v1114 = vmul.f32 %v1108, 1.442695
        %v1115 = vpow.pop %v1114
        %v1116 = vmul.f32 %v1109, 1.442695
        %v1117 = vpow.pop %v1116
        %v1118 = vsel %vm993, %v1111, 0.0
        %1119 = vadd.xlane.f32.xlu0 %v1118
        %v1120 = vpop.xlane.xlu0 %1119
        %v1121 = vsel %vm993, %v1113, 0.0
        %1122 = vadd.xlane.f32.xlu0 %v1121
        %v1123 = vpop.xlane.xlu0 %1122
        %v1124 = vsel %vm993, %v1115, 0.0
        %1125 = vadd.xlane.f32.xlu0 %v1124
        %v1126 = vpop.xlane.xlu0 %1125
        %v1127 = vsel %vm993, %v1117, 0.0
        %1128 = vadd.xlane.f32.xlu0 %v1127
        %v1129 = vpop.xlane.xlu0 %1128
        %v1130 = vrcp.pop %v1120
        %v1131 = vrcp.pop %v1123
        %v1132 = vrcp.pop %v1126
        %v1133 = vrcp.pop %v1129
        %v1134 = vmul.f32 %v1111, %v1130
        %v1135 = vmul.f32 %v1113, %v1131
        %v1136 = vmul.f32 %v1115, %v1132
        %v1137 = vmul.f32 %v1117, %v1133
        %1138 = vrot.lane.b32.xlu0 %v963, 96
        %v1139 = vpop.permute.xlu0 %1138
        %v1142 = vsel %vm993, %v1134, 0
        %1144 = vmatpush.msra.mxu0 0.0
        %1145 = vmatpush.msra.mxu0 0.0
        %1146 = vmatpush.msra.mxu0 0.0
        %1147 = vmatpush.msra.mxu0 0.0
        %1148 = vmatpush.msra.mxu0 0.0
        %1149 = vmatpush.msra.mxu0 0.0
        %1150 = vmatpush.msra.mxu0 0.0
        %1151 = vmatpush.msra.mxu0 0.0
        %1152 = vmatpush.msra.mxu0 0.0
        %1153 = vmatpush.msra.mxu0 0.0
        %1154 = vmatpush.msra.mxu0 0.0
        %1155 = vmatpush.msra.mxu0 0.0
        %1156 = vmatpush.msra.mxu0 0.0
        %1157 = vmatpush.msra.mxu0 0.0
        %1158 = vmatpush.msra.mxu0 0.0
        %1159 = vmatpush.msra.mxu0 %v1139
        %1160 = vmatmul.f32.gmra.mxu0 %v1142
        %v1161 = vpop.f32.mrf.mxu0
        %v1162 = vadd.f32 0.0, %v1161
        %1163 = vdwg.mxu0
        %1164 = vrot.lane.b32.xlu0 %v988, 96
        %v1165 = vpop.permute.xlu0 %1164
        %v1168 = vsel %vm993, %v1135, 0
        %1170 = vmatpush.msra.mxu0 0.0
        %1171 = vmatpush.msra.mxu0 0.0
        %1172 = vmatpush.msra.mxu0 0.0
        %1173 = vmatpush.msra.mxu0 0.0
        %1174 = vmatpush.msra.mxu0 0.0
        %1175 = vmatpush.msra.mxu0 0.0
        %1176 = vmatpush.msra.mxu0 0.0
        %1177 = vmatpush.msra.mxu0 0.0
        %1178 = vmatpush.msra.mxu0 0.0
        %1179 = vmatpush.msra.mxu0 0.0
        %1180 = vmatpush.msra.mxu0 0.0
        %1181 = vmatpush.msra.mxu0 0.0
        %1182 = vmatpush.msra.mxu0 0.0
        %1183 = vmatpush.msra.mxu0 0.0
        %1184 = vmatpush.msra.mxu0 0.0
        %1185 = vmatpush.msra.mxu0 %v1165
        %1186 = vmatmul.f32.gmra.mxu0 %v1168
        %v1187 = vpop.f32.mrf.mxu0
        %v1188 = vadd.f32 0.0, %v1187
        %1189 = vdwg.mxu0
        %1190 = vrot.lane.b32.xlu0 %v990, 96
        %v1191 = vpop.permute.xlu0 %1190
        %v1194 = vsel %vm993, %v1136, 0
        %1196 = vmatpush.msra.mxu0 0.0
        %1197 = vmatpush.msra.mxu0 0.0
        %1198 = vmatpush.msra.mxu0 0.0
        %1199 = vmatpush.msra.mxu0 0.0
        %1200 = vmatpush.msra.mxu0 0.0
        %1201 = vmatpush.msra.mxu0 0.0
        %1202 = vmatpush.msra.mxu0 0.0
        %1203 = vmatpush.msra.mxu0 0.0
        %1204 = vmatpush.msra.mxu0 0.0
        %1205 = vmatpush.msra.mxu0 0.0
        %1206 = vmatpush.msra.mxu0 0.0
        %1207 = vmatpush.msra.mxu0 0.0
        %1208 = vmatpush.msra.mxu0 0.0
        %1209 = vmatpush.msra.mxu0 0.0
        %1210 = vmatpush.msra.mxu0 0.0
        %1211 = vmatpush.msra.mxu0 %v1191
        %1212 = vmatmul.f32.gmra.mxu0 %v1194
        %v1213 = vpop.f32.mrf.mxu0
        %v1214 = vadd.f32 0.0, %v1213
        %1215 = vdwg.mxu0
        %1216 = vrot.lane.b32.xlu0 %v992, 96
        %v1217 = vpop.permute.xlu0 %1216
        %v1220 = vsel %vm993, %v1137, 0
        %1222 = vmatpush.msra.mxu0 0.0
        %1223 = vmatpush.msra.mxu0 0.0
        %1224 = vmatpush.msra.mxu0 0.0
        %1225 = vmatpush.msra.mxu0 0.0
        %1226 = vmatpush.msra.mxu0 0.0
        %1227 = vmatpush.msra.mxu0 0.0
        %1228 = vmatpush.msra.mxu0 0.0
        %1229 = vmatpush.msra.mxu0 0.0
        %1230 = vmatpush.msra.mxu0 0.0
        %1231 = vmatpush.msra.mxu0 0.0
        %1232 = vmatpush.msra.mxu0 0.0
        %1233 = vmatpush.msra.mxu0 0.0
        %1234 = vmatpush.msra.mxu0 0.0
        %1235 = vmatpush.msra.mxu0 0.0
        %1236 = vmatpush.msra.mxu0 0.0
        %1237 = vmatpush.msra.mxu0 %v1217
        %1238 = vmatmul.f32.gmra.mxu0 %v1220
        %v1239 = vpop.f32.mrf.mxu0
        %v1240 = vadd.f32 0.0, %v1239
        %1241 = vdwg.mxu0
        %v1243 = vsel %vm993, %v1162, 0
        %1245 = vmatpush.msra.mxu0 0.0
        %1246 = vmatpush.msra.mxu0 0.0
        %1247 = vmatpush.msra.mxu0 0.0
        %1248 = vmatpush.msra.mxu0 0.0
        %1249 = vmatpush.msra.mxu0 0.0
        %1250 = vmatpush.msra.mxu0 0.0
        %1251 = vmatpush.msra.mxu0 0.0
        %1252 = vmatpush.msra.mxu0 0.0
        %1253 = vmatpush.msra.mxu0 0.0
        %1254 = vmatpush.msra.mxu0 0.0
        %1255 = vmatpush.msra.mxu0 0.0
        %1256 = vmatpush.msra.mxu0 0.0
        %1257 = vmatpush.msra.mxu0 0.0
        %1258 = vmatpush.msra.mxu0 0.0
        %1259 = vmatpush.msra.mxu0 0.0
        %1260 = vmatpush.msra.mxu0 %v965
        %1261 = vmatmul.f32.gmra.mxu0 %v1243
        %v1262 = vpop.f32.mrf.mxu0
        %v1263 = vadd.f32 0.0, %v1262
        %1264 = vdwg.mxu0
        %v1266 = vsel %vm993, %v1188, 0
        %1268 = vmatpush.msra.mxu0 0.0
        %1269 = vmatpush.msra.mxu0 0.0
        %1270 = vmatpush.msra.mxu0 0.0
        %1271 = vmatpush.msra.mxu0 0.0
        %1272 = vmatpush.msra.mxu0 0.0
        %1273 = vmatpush.msra.mxu0 0.0
        %1274 = vmatpush.msra.mxu0 0.0
        %1275 = vmatpush.msra.mxu0 0.0
        %1276 = vmatpush.msra.mxu0 0.0
        %1277 = vmatpush.msra.mxu0 0.0
        %1278 = vmatpush.msra.mxu0 0.0
        %1279 = vmatpush.msra.mxu0 0.0
        %1280 = vmatpush.msra.mxu0 0.0
        %1281 = vmatpush.msra.mxu0 0.0
        %1282 = vmatpush.msra.mxu0 0.0
        %1283 = vmatpush.msra.mxu0 %v966
        %1284 = vmatmul.f32.gmra.mxu0 %v1266
        %v1285 = vpop.f32.mrf.mxu0
        %v1286 = vadd.f32 0.0, %v1285
        %1287 = vdwg.mxu0
        %v1289 = vsel %vm993, %v1214, 0
        %1291 = vmatpush.msra.mxu0 0.0
        %1292 = vmatpush.msra.mxu0 0.0
        %1293 = vmatpush.msra.mxu0 0.0
        %1294 = vmatpush.msra.mxu0 0.0
        %1295 = vmatpush.msra.mxu0 0.0
        %1296 = vmatpush.msra.mxu0 0.0
        %1297 = vmatpush.msra.mxu0 0.0
        %1298 = vmatpush.msra.mxu0 0.0
        %1299 = vmatpush.msra.mxu0 0.0
        %1300 = vmatpush.msra.mxu0 0.0
        %1301 = vmatpush.msra.mxu0 0.0
        %1302 = vmatpush.msra.mxu0 0.0
        %1303 = vmatpush.msra.mxu0 0.0
        %1304 = vmatpush.msra.mxu0 0.0
        %1305 = vmatpush.msra.mxu0 0.0
        %1306 = vmatpush.msra.mxu0 %v967
        %1307 = vmatmul.f32.gmra.mxu0 %v1289
        %v1308 = vpop.f32.mrf.mxu0
        %v1309 = vadd.f32 0.0, %v1308
        %1310 = vdwg.mxu0
        %v1312 = vsel %vm993, %v1240, 0
        %1314 = vmatpush.msra.mxu0 0.0
        %1315 = vmatpush.msra.mxu0 0.0
        %1316 = vmatpush.msra.mxu0 0.0
        %1317 = vmatpush.msra.mxu0 0.0
        %1318 = vmatpush.msra.mxu0 0.0
        %1319 = vmatpush.msra.mxu0 0.0
        %1320 = vmatpush.msra.mxu0 0.0
        %1321 = vmatpush.msra.mxu0 0.0
        %1322 = vmatpush.msra.mxu0 0.0
        %1323 = vmatpush.msra.mxu0 0.0
        %1324 = vmatpush.msra.mxu0 0.0
        %1325 = vmatpush.msra.mxu0 0.0
        %1326 = vmatpush.msra.mxu0 0.0
        %1327 = vmatpush.msra.mxu0 0.0
        %1328 = vmatpush.msra.mxu0 0.0
        %1329 = vmatpush.msra.mxu0 %v968
        %1330 = vmatmul.f32.gmra.mxu0 %v1312
        %v1331 = vpop.f32.mrf.mxu0
        %v1332 = vadd.f32 0.0, %v1331
        %1333 = vdwg.mxu0
        %v1334 = vsel %vm911, %v1263, 0.0
        %v1335 = vsel %vm911, %v1286, 0.0
        %v1336 = vadd.f32 %v1334, %v1335
        %v1337 = vsel %vm911, %v1309, 0.0
        %v1338 = vadd.f32 %v1336, %v1337
        %v1339 = vsel %vm911, %v1332, 0.0
        %v1340 = vadd.f32 %v1338, %v1339
        %v1342 = vperm.slane %v969, 0
        %v1344 = vadd.f32 %v1340, %v1342
        %v1345 = vadd.f32 %v901, %v1344
        %v1346 = vsel %vm911, %v1345, 0.0
        %1347 = vadd.xlane.f32.xlu0 %v1346
        %v1348 = vpop.xlane.xlu0 %1347
        %v1349 = vrot.slane %v1348, 4
        %v1350 = vadd.f32 %v1348, %v1349
        %v1351 = vrot.slane %v1350, 2
        %v1352 = vadd.f32 %v1350, %v1351
        %v1353 = vrot.slane %v1352, 1
        %v1354 = vadd.f32 %v1352, %v1353
        %s1355 = vtos %v1354
        %v1356 = vrcp.pop 256.0
        %v1357 = vmul.f32 256.0, %v1356
        %v1358 = vsub.f32 1.0, %v1357
        %v1359 = vmul.f32 %v1356, %v1358
        %v1360 = vadd.f32 %v1356, %v1359
        %vm1361 = vweird.f32 %v1356
        %v1362 = vsel %vm1361, %v1356, %v1360
        %s1363 = vtos %v1362
        %s1364 = smul.f32 %s1355, %s1363
        %v1365 = vstv %s1364
        %v1366 = vsub.f32 %v1345, %v1365
        %v1367 = vmul.f32 %v1366, %v1366
        %v1368 = vsel %vm911, %v1367, 0.0
        %1369 = vadd.xlane.f32.xlu0 %v1368
        %v1370 = vpop.xlane.xlu0 %1369
        %v1371 = vrot.slane %v1370, 4
        %v1372 = vadd.f32 %v1370, %v1371
        %v1373 = vrot.slane %v1372, 2
        %v1374 = vadd.f32 %v1372, %v1373
        %v1375 = vrot.slane %v1374, 1
        %v1376 = vadd.f32 %v1374, %v1375
        %s1377 = vtos %v1376
        %v1378 = vrcp.pop 256.0
        %v1379 = vmul.f32 256.0, %v1378
        %v1380 = vsub.f32 1.0, %v1379
        %v1381 = vmul.f32 %v1378, %v1380
        %v1382 = vadd.f32 %v1378, %v1381
        %vm1383 = vweird.f32 %v1378
        %v1384 = vsel %vm1383, %v1378, %v1382
        %s1385 = vtos %v1384
        %s1386 = smul.f32 %s1377, %s1385
        %s1387 = sadd.f32 %s1386, 1e-05
        %v1388 = vstv %s1387
        %v1389 = vrsqrt.pop %v1388
        %v1390 = vmul.f32 %v1389, %v1388
        %v1391 = vmul.f32 %v1390, %v1389
        %v1392 = vmul.f32 0.5, %v1391
        %v1393 = vsub.f32 1.5, %v1392
        %v1394 = vmul.f32 %v1389, %v1393
        %vm1395 = vweird.f32 %v1388
        %vm1396 = vweird.f32 %v1389
        %vm1397 = vmor %vm1395, %vm1396
        %v1398 = vsel %vm1397, %v1389, %v1394
        %s1399 = vtos %v1398
        %v1400 = vstv %s1399
        %v1401 = vmul.f32 %v1366, %v1400
        %v1402 = vmul.f32 %v1401, %v970
        %v1403 = vadd.f32 %v1402, %v971
        %v1404 = vld [vmem:[%s10] sm:$0xff]
        %v1405 = vld [vmem:[%s10 + $0x8] sm:$0xff]
        %v1406 = vld [vmem:[%s10 + $0x10] sm:$0xff]
        %v1407 = vld [vmem:[%s10 + $0x18] sm:$0xff]
        %v1408 = vld [vmem:[#allocation14] sm:$0x1]
        %v1410 = vperm.slane %v1408, 0
        %v1413 = vsel %vm911, %v1403, 0
        %1415 = vmatpush.msra.mxu0 0.0
        %1416 = vmatpush.msra.mxu0 0.0
        %1417 = vmatpush.msra.mxu0 0.0
        %1418 = vmatpush.msra.mxu0 0.0
        %1419 = vmatpush.msra.mxu0 0.0
        %1420 = vmatpush.msra.mxu0 0.0
        %1421 = vmatpush.msra.mxu0 0.0
        %1422 = vmatpush.msra.mxu0 0.0
        %1423 = vmatpush.msra.mxu0 0.0
        %1424 = vmatpush.msra.mxu0 0.0
        %1425 = vmatpush.msra.mxu0 0.0
        %1426 = vmatpush.msra.mxu0 0.0
        %1427 = vmatpush.msra.mxu0 %v1407
        %1428 = vmatpush.msra.mxu0 %v1406
        %1429 = vmatpush.msra.mxu0 %v1405
        %1430 = vmatpush.msra.mxu0 %v1404
        %1431 = vmatmul.f32.gmra.mxu0 %v1413
        %v1432 = vpop.f32.mrf.mxu0
        %v1433 = vadd.f32 %v1410, %v1432
        %1434 = vdwg.mxu0
        %v1435 = vld [vmem:[%s12] sm:$0xff]
        %v1436 = vld [vmem:[%s12 + $0x8] sm:$0xff]
        %v1437 = vld [vmem:[%s12 + $0x10] sm:$0xff]
        %v1438 = vld [vmem:[%s12 + $0x18] sm:$0xff]
        %v1439 = vld [vmem:[#allocation16] sm:$0x1]
        %v1440 = vld [vmem:[%s14] sm:$0xff]
        %v1441 = vld [vmem:[#allocation17] sm:$0xff]
        %1443 = vrot.lane.b32.xlu0 %v1433, 120
        %v1444 = vpop.permute.xlu0 %1443
        %1446 = vrot.lane.b32.xlu0 %v1433, 112
        %v1447 = vpop.permute.xlu0 %1446
        %1449 = vrot.lane.b32.xlu0 %v1433, 104
        %v1450 = vpop.permute.xlu0 %1449
        %v1452 = vmul.f32 %v1433, 0.125
        %v1453 = vmul.f32 %v1444, 0.125
        %v1454 = vmul.f32 %v1447, 0.125
        %v1455 = vmul.f32 %v1450, 0.125
        %1456 = vrot.lane.b32.xlu0 %v1433, 96
        %v1457 = vpop.permute.xlu0 %1456
        %v1459 = vsel %vm993, %v1452, 0
        %v1461 = vsel %vm993, %v1457, 0
        %1463 = vmatpush.xpose.msra.mxu0 0.0
        %1464 = vmatpush.xpose.msra.mxu0 0.0
        %1465 = vmatpush.xpose.msra.mxu0 0.0
        %1466 = vmatpush.xpose.msra.mxu0 0.0
        %1467 = vmatpush.xpose.msra.mxu0 0.0
        %1468 = vmatpush.xpose.msra.mxu0 0.0
        %1469 = vmatpush.xpose.msra.mxu0 0.0
        %1470 = vmatpush.xpose.msra.mxu0 0.0
        %1471 = vmatpush.xpose.msra.mxu0 0.0
        %1472 = vmatpush.xpose.msra.mxu0 0.0
        %1473 = vmatpush.xpose.msra.mxu0 0.0
        %1474 = vmatpush.xpose.msra.mxu0 0.0
        %1475 = vmatpush.xpose.msra.mxu0 0.0
        %1476 = vmatpush.xpose.msra.mxu0 0.0
        %1477 = vmatpush.xpose.msra.mxu0 0.0
        %1478 = vmatpush.xpose.msra.mxu0 %v1461
        %1479 = vmatmul.f32.gmra.mxu0 %v1459
        %v1480 = vpop.f32.mrf.mxu0
        %v1481 = vadd.f32 0.0, %v1480
        %1482 = vdwg.mxu0
        %1483 = vrot.lane.b32.xlu0 %v1444, 96
        %v1484 = vpop.permute.xlu0 %1483
        %v1486 = vsel %vm993, %v1453, 0
        %v1488 = vsel %vm993, %v1484, 0
        %1490 = vmatpush.xpose.msra.mxu0 0.0
        %1491 = vmatpush.xpose.msra.mxu0 0.0
        %1492 = vmatpush.xpose.msra.mxu0 0.0
        %1493 = vmatpush.xpose.msra.mxu0 0.0
        %1494 = vmatpush.xpose.msra.mxu0 0.0
        %1495 = vmatpush.xpose.msra.mxu0 0.0
        %1496 = vmatpush.xpose.msra.mxu0 0.0
        %1497 = vmatpush.xpose.msra.mxu0 0.0
        %1498 = vmatpush.xpose.msra.mxu0 0.0
        %1499 = vmatpush.xpose.msra.mxu0 0.0
        %1500 = vmatpush.xpose.msra.mxu0 0.0
        %1501 = vmatpush.xpose.msra.mxu0 0.0
        %1502 = vmatpush.xpose.msra.mxu0 0.0
        %1503 = vmatpush.xpose.msra.mxu0 0.0
        %1504 = vmatpush.xpose.msra.mxu0 0.0
        %1505 = vmatpush.xpose.msra.mxu0 %v1488
        %1506 = vmatmul.f32.gmra.mxu0 %v1486
        %v1507 = vpop.f32.mrf.mxu0
        %v1508 = vadd.f32 0.0, %v1507
        %1509 = vdwg.mxu0
        %1510 = vrot.lane.b32.xlu0 %v1447, 96
        %v1511 = vpop.permute.xlu0 %1510
        %v1513 = vsel %vm993, %v1454, 0
        %v1515 = vsel %vm993, %v1511, 0
        %1517 = vmatpush.xpose.msra.mxu0 0.0
        %1518 = vmatpush.xpose.msra.mxu0 0.0
        %1519 = vmatpush.xpose.msra.mxu0 0.0
        %1520 = vmatpush.xpose.msra.mxu0 0.0
        %1521 = vmatpush.xpose.msra.mxu0 0.0
        %1522 = vmatpush.xpose.msra.mxu0 0.0
        %1523 = vmatpush.xpose.msra.mxu0 0.0
        %1524 = vmatpush.xpose.msra.mxu0 0.0
        %1525 = vmatpush.xpose.msra.mxu0 0.0
        %1526 = vmatpush.xpose.msra.mxu0 0.0
        %1527 = vmatpush.xpose.msra.mxu0 0.0
        %1528 = vmatpush.xpose.msra.mxu0 0.0
        %1529 = vmatpush.xpose.msra.mxu0 0.0
        %1530 = vmatpush.xpose.msra.mxu0 0.0
        %1531 = vmatpush.xpose.msra.mxu0 0.0
        %1532 = vmatpush.xpose.msra.mxu0 %v1515
        %1533 = vmatmul.f32.gmra.mxu0 %v1513
        %v1534 = vpop.f32.mrf.mxu0
        %v1535 = vadd.f32 0.0, %v1534
        %1536 = vdwg.mxu0
        %1537 = vrot.lane.b32.xlu0 %v1450, 96
        %v1538 = vpop.permute.xlu0 %1537
        %v1540 = vsel %vm993, %v1455, 0
        %v1542 = vsel %vm993, %v1538, 0
        %1544 = vmatpush.xpose.msra.mxu0 0.0
        %1545 = vmatpush.xpose.msra.mxu0 0.0
        %1546 = vmatpush.xpose.msra.mxu0 0.0
        %1547 = vmatpush.xpose.msra.mxu0 0.0
        %1548 = vmatpush.xpose.msra.mxu0 0.0
        %1549 = vmatpush.xpose.msra.mxu0 0.0
        %1550 = vmatpush.xpose.msra.mxu0 0.0
        %1551 = vmatpush.xpose.msra.mxu0 0.0
        %1552 = vmatpush.xpose.msra.mxu0 0.0
        %1553 = vmatpush.xpose.msra.mxu0 0.0
        %1554 = vmatpush.xpose.msra.mxu0 0.0
        %1555 = vmatpush.xpose.msra.mxu0 0.0
        %1556 = vmatpush.xpose.msra.mxu0 0.0
        %1557 = vmatpush.xpose.msra.mxu0 0.0
        %1558 = vmatpush.xpose.msra.mxu0 0.0
        %1559 = vmatpush.xpose.msra.mxu0 %v1542
        %1560 = vmatmul.f32.gmra.mxu0 %v1540
        %v1561 = vpop.f32.mrf.mxu0
        %v1562 = vadd.f32 0.0, %v1561
        %1563 = vdwg.mxu0
        %v1564 = vsel %vm993, %v1481, -inf
        %1565 = vmax.xlane.f32.xlu0 %v1564
        %v1566 = vpop.xlane.xlu0 %1565
        %v1567 = vsel %vm993, %v1508, -inf
        %1568 = vmax.xlane.f32.xlu0 %v1567
        %v1569 = vpop.xlane.xlu0 %1568
        %v1570 = vsel %vm993, %v1535, -inf
        %1571 = vmax.xlane.f32.xlu0 %v1570
        %v1572 = vpop.xlane.xlu0 %1571
        %v1573 = vsel %vm993, %v1562, -inf
        %1574 = vmax.xlane.f32.xlu0 %v1573
        %v1575 = vpop.xlane.xlu0 %1574
        %v1576 = vsub.f32 %v1481, %v1566
        %v1577 = vsub.f32 %v1508, %v1569
        %v1578 = vsub.f32 %v1535, %v1572
        %v1579 = vsub.f32 %v1562, %v1575
        %v1580 = vmul.f32 %v1576, 1.442695
        %v1581 = vpow.pop %v1580
        %v1582 = vmul.f32 %v1577, 1.442695
        %v1583 = vpow.pop %v1582
        %v1584 = vmul.f32 %v1578, 1.442695
        %v1585 = vpow.pop %v1584
        %v1586 = vmul.f32 %v1579, 1.442695
        %v1587 = vpow.pop %v1586
        %v1588 = vsel %vm993, %v1581, 0.0
        %1589 = vadd.xlane.f32.xlu0 %v1588
        %v1590 = vpop.xlane.xlu0 %1589
        %v1591 = vsel %vm993, %v1583, 0.0
        %1592 = vadd.xlane.f32.xlu0 %v1591
        %v1593 = vpop.xlane.xlu0 %1592
        %v1594 = vsel %vm993, %v1585, 0.0
        %1595 = vadd.xlane.f32.xlu0 %v1594
        %v1596 = vpop.xlane.xlu0 %1595
        %v1597 = vsel %vm993, %v1587, 0.0
        %1598 = vadd.xlane.f32.xlu0 %v1597
        %v1599 = vpop.xlane.xlu0 %1598
        %v1600 = vrcp.pop %v1590
        %v1601 = vrcp.pop %v1593
        %v1602 = vrcp.pop %v1596
        %v1603 = vrcp.pop %v1599
        %v1604 = vmul.f32 %v1581, %v1600
        %v1605 = vmul.f32 %v1583, %v1601
        %v1606 = vmul.f32 %v1585, %v1602
        %v1607 = vmul.f32 %v1587, %v1603
        %1608 = vrot.lane.b32.xlu0 %v1433, 64
        %v1609 = vpop.permute.xlu0 %1608
        %v1612 = vsel %vm993, %v1604, 0
        %1614 = vmatpush.msra.mxu0 0.0
        %1615 = vmatpush.msra.mxu0 0.0
        %1616 = vmatpush.msra.mxu0 0.0
        %1617 = vmatpush.msra.mxu0 0.0
        %1618 = vmatpush.msra.mxu0 0.0
        %1619 = vmatpush.msra.mxu0 0.0
        %1620 = vmatpush.msra.mxu0 0.0
        %1621 = vmatpush.msra.mxu0 0.0
        %1622 = vmatpush.msra.mxu0 0.0
        %1623 = vmatpush.msra.mxu0 0.0
        %1624 = vmatpush.msra.mxu0 0.0
        %1625 = vmatpush.msra.mxu0 0.0
        %1626 = vmatpush.msra.mxu0 0.0
        %1627 = vmatpush.msra.mxu0 0.0
        %1628 = vmatpush.msra.mxu0 0.0
        %1629 = vmatpush.msra.mxu0 %v1609
        %1630 = vmatmul.f32.gmra.mxu0 %v1612
        %v1631 = vpop.f32.mrf.mxu0
        %v1632 = vadd.f32 0.0, %v1631
        %1633 = vdwg.mxu0
        %1634 = vrot.lane.b32.xlu0 %v1444, 64
        %v1635 = vpop.permute.xlu0 %1634
        %v1638 = vsel %vm993, %v1605, 0
        %1640 = vmatpush.msra.mxu0 0.0
        %1641 = vmatpush.msra.mxu0 0.0
        %1642 = vmatpush.msra.mxu0 0.0
        %1643 = vmatpush.msra.mxu0 0.0
        %1644 = vmatpush.msra.mxu0 0.0
        %1645 = vmatpush.msra.mxu0 0.0
        %1646 = vmatpush.msra.mxu0 0.0
        %1647 = vmatpush.msra.mxu0 0.0
        %1648 = vmatpush.msra.mxu0 0.0
        %1649 = vmatpush.msra.mxu0 0.0
        %1650 = vmatpush.msra.mxu0 0.0
        %1651 = vmatpush.msra.mxu0 0.0
        %1652 = vmatpush.msra.mxu0 0.0
        %1653 = vmatpush.msra.mxu0 0.0
        %1654 = vmatpush.msra.mxu0 0.0
        %1655 = vmatpush.msra.mxu0 %v1635
        %1656 = vmatmul.f32.gmra.mxu0 %v1638
        %v1657 = vpop.f32.mrf.mxu0
        %v1658 = vadd.f32 0.0, %v1657
        %1659 = vdwg.mxu0
        %1660 = vrot.lane.b32.xlu0 %v1447, 64
        %v1661 = vpop.permute.xlu0 %1660
        %v1664 = vsel %vm993, %v1606, 0
        %1666 = vmatpush.msra.mxu0 0.0
        %1667 = vmatpush.msra.mxu0 0.0
        %1668 = vmatpush.msra.mxu0 0.0
        %1669 = vmatpush.msra.mxu0 0.0
        %1670 = vmatpush.msra.mxu0 0.0
        %1671 = vmatpush.msra.mxu0 0.0
        %1672 = vmatpush.msra.mxu0 0.0
        %1673 = vmatpush.msra.mxu0 0.0
        %1674 = vmatpush.msra.mxu0 0.0
        %1675 = vmatpush.msra.mxu0 0.0
        %1676 = vmatpush.msra.mxu0 0.0
        %1677 = vmatpush.msra.mxu0 0.0
        %1678 = vmatpush.msra.mxu0 0.0
        %1679 = vmatpush.msra.mxu0 0.0
        %1680 = vmatpush.msra.mxu0 0.0
        %1681 = vmatpush.msra.mxu0 %v1661
        %1682 = vmatmul.f32.gmra.mxu0 %v1664
        %v1683 = vpop.f32.mrf.mxu0
        %v1684 = vadd.f32 0.0, %v1683
        %1685 = vdwg.mxu0
        %1686 = vrot.lane.b32.xlu0 %v1450, 64
        %v1687 = vpop.permute.xlu0 %1686
        %v1690 = vsel %vm993, %v1607, 0
        %1692 = vmatpush.msra.mxu0 0.0
        %1693 = vmatpush.msra.mxu0 0.0
        %1694 = vmatpush.msra.mxu0 0.0
        %1695 = vmatpush.msra.mxu0 0.0
        %1696 = vmatpush.msra.mxu0 0.0
        %1697 = vmatpush.msra.mxu0 0.0
        %1698 = vmatpush.msra.mxu0 0.0
        %1699 = vmatpush.msra.mxu0 0.0
        %1700 = vmatpush.msra.mxu0 0.0
        %1701 = vmatpush.msra.mxu0 0.0
        %1702 = vmatpush.msra.mxu0 0.0
        %1703 = vmatpush.msra.mxu0 0.0
        %1704 = vmatpush.msra.mxu0 0.0
        %1705 = vmatpush.msra.mxu0 0.0
        %1706 = vmatpush.msra.mxu0 0.0
        %1707 = vmatpush.msra.mxu0 %v1687
        %1708 = vmatmul.f32.gmra.mxu0 %v1690
        %v1709 = vpop.f32.mrf.mxu0
        %v1710 = vadd.f32 0.0, %v1709
        %1711 = vdwg.mxu0
        %v1713 = vsel %vm993, %v1632, 0
        %1715 = vmatpush.msra.mxu0 0.0
        %1716 = vmatpush.msra.mxu0 0.0
        %1717 = vmatpush.msra.mxu0 0.0
        %1718 = vmatpush.msra.mxu0 0.0
        %1719 = vmatpush.msra.mxu0 0.0
        %1720 = vmatpush.msra.mxu0 0.0
        %1721 = vmatpush.msra.mxu0 0.0
        %1722 = vmatpush.msra.mxu0 0.0
        %1723 = vmatpush.msra.mxu0 0.0
        %1724 = vmatpush.msra.mxu0 0.0
        %1725 = vmatpush.msra.mxu0 0.0
        %1726 = vmatpush.msra.mxu0 0.0
        %1727 = vmatpush.msra.mxu0 0.0
        %1728 = vmatpush.msra.mxu0 0.0
        %1729 = vmatpush.msra.mxu0 0.0
        %1730 = vmatpush.msra.mxu0 %v1435
        %1731 = vmatmul.f32.gmra.mxu0 %v1713
        %v1732 = vpop.f32.mrf.mxu0
        %v1733 = vadd.f32 0.0, %v1732
        %1734 = vdwg.mxu0
        %v1736 = vsel %vm993, %v1658, 0
        %1738 = vmatpush.msra.mxu0 0.0
        %1739 = vmatpush.msra.mxu0 0.0
        %1740 = vmatpush.msra.mxu0 0.0
        %1741 = vmatpush.msra.mxu0 0.0
        %1742 = vmatpush.msra.mxu0 0.0
        %1743 = vmatpush.msra.mxu0 0.0
        %1744 = vmatpush.msra.mxu0 0.0
        %1745 = vmatpush.msra.mxu0 0.0
        %1746 = vmatpush.msra.mxu0 0.0
        %1747 = vmatpush.msra.mxu0 0.0
        %1748 = vmatpush.msra.mxu0 0.0
        %1749 = vmatpush.msra.mxu0 0.0
        %1750 = vmatpush.msra.mxu0 0.0
        %1751 = vmatpush.msra.mxu0 0.0
        %1752 = vmatpush.msra.mxu0 0.0
        %1753 = vmatpush.msra.mxu0 %v1436
        %1754 = vmatmul.f32.gmra.mxu0 %v1736
        %v1755 = vpop.f32.mrf.mxu0
        %v1756 = vadd.f32 0.0, %v1755
        %1757 = vdwg.mxu0
        %v1759 = vsel %vm993, %v1684, 0
        %1761 = vmatpush.msra.mxu0 0.0
        %1762 = vmatpush.msra.mxu0 0.0
        %1763 = vmatpush.msra.mxu0 0.0
        %1764 = vmatpush.msra.mxu0 0.0
        %1765 = vmatpush.msra.mxu0 0.0
        %1766 = vmatpush.msra.mxu0 0.0
        %1767 = vmatpush.msra.mxu0 0.0
        %1768 = vmatpush.msra.mxu0 0.0
        %1769 = vmatpush.msra.mxu0 0.0
        %1770 = vmatpush.msra.mxu0 0.0
        %1771 = vmatpush.msra.mxu0 0.0
        %1772 = vmatpush.msra.mxu0 0.0
        %1773 = vmatpush.msra.mxu0 0.0
        %1774 = vmatpush.msra.mxu0 0.0
        %1775 = vmatpush.msra.mxu0 0.0
        %1776 = vmatpush.msra.mxu0 %v1437
        %1777 = vmatmul.f32.gmra.mxu0 %v1759
        %v1778 = vpop.f32.mrf.mxu0
        %v1779 = vadd.f32 0.0, %v1778
        %1780 = vdwg.mxu0
        %v1782 = vsel %vm993, %v1710, 0
        %1784 = vmatpush.msra.mxu0 0.0
        %1785 = vmatpush.msra.mxu0 0.0
        %1786 = vmatpush.msra.mxu0 0.0
        %1787 = vmatpush.msra.mxu0 0.0
        %1788 = vmatpush.msra.mxu0 0.0
        %1789 = vmatpush.msra.mxu0 0.0
        %1790 = vmatpush.msra.mxu0 0.0
        %1791 = vmatpush.msra.mxu0 0.0
        %1792 = vmatpush.msra.mxu0 0.0
        %1793 = vmatpush.msra.mxu0 0.0
        %1794 = vmatpush.msra.mxu0 0.0
        %1795 = vmatpush.msra.mxu0 0.0
        %1796 = vmatpush.msra.mxu0 0.0
        %1797 = vmatpush.msra.mxu0 0.0
        %1798 = vmatpush.msra.mxu0 0.0
        %1799 = vmatpush.msra.mxu0 %v1438
        %1800 = vmatmul.f32.gmra.mxu0 %v1782
        %v1801 = vpop.f32.mrf.mxu0
        %v1802 = vadd.f32 0.0, %v1801
        %1803 = vdwg.mxu0
        %v1804 = vsel %vm911, %v1733, 0.0
        %v1805 = vsel %vm911, %v1756, 0.0
        %v1806 = vadd.f32 %v1804, %v1805
        %v1807 = vsel %vm911, %v1779, 0.0
        %v1808 = vadd.f32 %v1806, %v1807
        %v1809 = vsel %vm911, %v1802, 0.0
        %v1810 = vadd.f32 %v1808, %v1809
        %v1812 = vperm.slane %v1439, 0
        %v1814 = vadd.f32 %v1810, %v1812
        %v1815 = vadd.f32 %v1403, %v1814
        %v1816 = vsel %vm911, %v1815, 0.0
        %1817 = vadd.xlane.f32.xlu0 %v1816
        %v1818 = vpop.xlane.xlu0 %1817
        %v1819 = vrot.slane %v1818, 4
        %v1820 = vadd.f32 %v1818, %v1819
        %v1821 = vrot.slane %v1820, 2
        %v1822 = vadd.f32 %v1820, %v1821
        %v1823 = vrot.slane %v1822, 1
        %v1824 = vadd.f32 %v1822, %v1823
        %s1825 = vtos %v1824
        %v1826 = vrcp.pop 256.0
        %v1827 = vmul.f32 256.0, %v1826
        %v1828 = vsub.f32 1.0, %v1827
        %v1829 = vmul.f32 %v1826, %v1828
        %v1830 = vadd.f32 %v1826, %v1829
        %vm1831 = vweird.f32 %v1826
        %v1832 = vsel %vm1831, %v1826, %v1830
        %s1833 = vtos %v1832
        %s1834 = smul.f32 %s1825, %s1833
        %v1835 = vstv %s1834
        %v1836 = vsub.f32 %v1815, %v1835
        %v1837 = vmul.f32 %v1836, %v1836
        %v1838 = vsel %vm911, %v1837, 0.0
        %1839 = vadd.xlane.f32.xlu0 %v1838
        %v1840 = vpop.xlane.xlu0 %1839
        %v1841 = vrot.slane %v1840, 4
        %v1842 = vadd.f32 %v1840, %v1841
        %v1843 = vrot.slane %v1842, 2
        %v1844 = vadd.f32 %v1842, %v1843
        %v1845 = vrot.slane %v1844, 1
        %v1846 = vadd.f32 %v1844, %v1845
        %s1847 = vtos %v1846
        %v1848 = vrcp.pop 256.0
        %v1849 = vmul.f32 256.0, %v1848
        %v1850 = vsub.f32 1.0, %v1849
        %v1851 = vmul.f32 %v1848, %v1850
        %v1852 = vadd.f32 %v1848, %v1851
        %vm1853 = vweird.f32 %v1848
        %v1854 = vsel %vm1853, %v1848, %v1852
        %s1855 = vtos %v1854
        %s1856 = smul.f32 %s1847, %s1855
        %s1857 = sadd.f32 %s1856, 1e-05
        %v1858 = vstv %s1857
        %v1859 = vrsqrt.pop %v1858
        %v1860 = vmul.f32 %v1859, %v1858
        %v1861 = vmul.f32 %v1860, %v1859
        %v1862 = vmul.f32 0.5, %v1861
        %v1863 = vsub.f32 1.5, %v1862
        %v1864 = vmul.f32 %v1859, %v1863
        %vm1865 = vweird.f32 %v1858
        %vm1866 = vweird.f32 %v1859
        %vm1867 = vmor %vm1865, %vm1866
        %v1868 = vsel %vm1867, %v1859, %v1864
        %s1869 = vtos %v1868
        %v1870 = vstv %s1869
        %v1871 = vmul.f32 %v1836, %v1870
        %v1872 = vmul.f32 %v1871, %v1440
        %v1873 = vadd.f32 %v1872, %v1441
        %v1874 = vld [vmem:[%s16] sm:$0xff]
        %v1875 = vld [vmem:[%s16 + $0x8] sm:$0xff]
        %v1876 = vld [vmem:[%s16 + $0x10] sm:$0xff]
        %v1877 = vld [vmem:[%s16 + $0x18] sm:$0xff]
        %v1878 = vld [vmem:[#allocation19] sm:$0x1]
        %v1880 = vperm.slane %v1878, 0
        %v1883 = vsel %vm911, %v1873, 0
        %1885 = vmatpush.msra.mxu0 0.0
        %1886 = vmatpush.msra.mxu0 0.0
        %1887 = vmatpush.msra.mxu0 0.0
        %1888 = vmatpush.msra.mxu0 0.0
        %1889 = vmatpush.msra.mxu0 0.0
        %1890 = vmatpush.msra.mxu0 0.0
        %1891 = vmatpush.msra.mxu0 0.0
        %1892 = vmatpush.msra.mxu0 0.0
        %1893 = vmatpush.msra.mxu0 0.0
        %1894 = vmatpush.msra.mxu0 0.0
        %1895 = vmatpush.msra.mxu0 0.0
        %1896 = vmatpush.msra.mxu0 0.0
        %1897 = vmatpush.msra.mxu0 %v1877
        %1898 = vmatpush.msra.mxu0 %v1876
        %1899 = vmatpush.msra.mxu0 %v1875
        %1900 = vmatpush.msra.mxu0 %v1874
        %1901 = vmatmul.f32.gmra.mxu0 %v1883
        %v1902 = vpop.f32.mrf.mxu0
        %v1903 = vadd.f32 %v1880, %v1902
        %1904 = vdwg.mxu0
        %v1905 = vmax.f32 %v1903, 0.0
        %v1906 = vld [vmem:[%s18] sm:$0xff]
        %v1907 = vld [vmem:[%s18 + $0x8] sm:$0xff]
        %v1908 = vld [vmem:[%s18 + $0x10] sm:$0xff]
        %v1909 = vld [vmem:[%s18 + $0x18] sm:$0xff]
        %v1910 = vld [vmem:[%s18 + $0x20] sm:$0xff]
        %v1911 = vld [vmem:[%s18 + $0x28] sm:$0xff]
        %v1912 = vld [vmem:[%s18 + $0x30] sm:$0xff]
        %v1913 = vld [vmem:[%s18 + $0x38] sm:$0xff]
        %v1914 = vld [vmem:[%s18 + $0x40] sm:$0xff]
        %v1915 = vld [vmem:[%s18 + $0x48] sm:$0xff]
        %v1916 = vld [vmem:[%s18 + $0x50] sm:$0xff]
        %v1917 = vld [vmem:[%s18 + $0x58] sm:$0xff]
        %v1918 = vld [vmem:[%s18 + $0x60] sm:$0xff]
        %v1919 = vld [vmem:[%s18 + $0x68] sm:$0xff]
        %v1920 = vld [vmem:[%s18 + $0x70] sm:$0xff]
        %v1921 = vld [vmem:[%s18 + $0x78] sm:$0xff]
        %v1922 = vld [vmem:[#allocation20] sm:$0x1]
        %v1924 = vperm.slane %v1922, 0
        %1926 = vmatpush.msra.mxu0 %v1921
        %1927 = vmatpush.msra.mxu0 %v1920
        %1928 = vmatpush.msra.mxu0 %v1919
        %1929 = vmatpush.msra.mxu0 %v1918
        %1930 = vmatpush.msra.mxu0 %v1917
        %1931 = vmatpush.msra.mxu0 %v1916
        %1932 = vmatpush.msra.mxu0 %v1915
        %1933 = vmatpush.msra.mxu0 %v1914
        %1934 = vmatpush.msra.mxu0 %v1913
        %1935 = vmatpush.msra.mxu0 %v1912
        %1936 = vmatpush.msra.mxu0 %v1911
        %1937 = vmatpush.msra.mxu0 %v1910
        %1938 = vmatpush.msra.mxu0 %v1909
        %1939 = vmatpush.msra.mxu0 %v1908
        %1940 = vmatpush.msra.mxu0 %v1907
        %1941 = vmatpush.msra.mxu0 %v1906
        %1942 = vmatmul.f32.gmra.mxu0 %v1905
        %v1943 = vpop.f32.mrf.mxu0
        %v1944 = vadd.f32 %v1924, %v1943
        %1945 = vdwg.mxu0
        %v1946 = vadd.f32 %v1944, %v1873
        %v1947 = vld [vmem:[%s20] sm:$0xff]
        %v1948 = vld [vmem:[#allocation22] sm:$0xff]
        %v1949 = vsel %vm911, %v1946, 0.0
        %1950 = vadd.xlane.f32.xlu0 %v1949
        %v1951 = vpop.xlane.xlu0 %1950
        %v1952 = vrot.slane %v1951, 4
        %v1953 = vadd.f32 %v1951, %v1952
        %v1954 = vrot.slane %v1953, 2
        %v1955 = vadd.f32 %v1953, %v1954
        %v1956 = vrot.slane %v1955, 1
        %v1957 = vadd.f32 %v1955, %v1956
        %s1958 = vtos %v1957
        %v1959 = vrcp.pop 256.0
        %v1960 = vmul.f32 256.0, %v1959
        %v1961 = vsub.f32 1.0, %v1960
        %v1962 = vmul.f32 %v1959, %v1961
        %v1963 = vadd.f32 %v1959, %v1962
        %vm1964 = vweird.f32 %v1959
        %v1965 = vsel %vm1964, %v1959, %v1963
        %s1966 = vtos %v1965
        %s1967 = smul.f32 %s1958, %s1966
        %v1968 = vstv %s1967
        %v1969 = vsub.f32 %v1946, %v1968
        %v1970 = vmul.f32 %v1969, %v1969
        %v1971 = vsel %vm911, %v1970, 0.0
        %1972 = vadd.xlane.f32.xlu0 %v1971
        %v1973 = vpop.xlane.xlu0 %1972
        %v1974 = vrot.slane %v1973, 4
        %v1975 = vadd.f32 %v1973, %v1974
        %v1976 = vrot.slane %v1975, 2
        %v1977 = vadd.f32 %v1975, %v1976
        %v1978 = vrot.slane %v1977, 1
        %v1979 = vadd.f32 %v1977, %v1978
        %s1980 = vtos %v1979
        %v1981 = vrcp.pop 256.0
        %v1982 = vmul.f32 256.0, %v1981
        %v1983 = vsub.f32 1.0, %v1982
        %v1984 = vmul.f32 %v1981, %v1983
        %v1985 = vadd.f32 %v1981, %v1984
        %vm1986 = vweird.f32 %v1981
        %v1987 = vsel %vm1986, %v1981, %v1985
        %s1988 = vtos %v1987
        %s1989 = smul.f32 %s1980, %s1988
        %s1990 = sadd.f32 %s1989, 1e-05
        %v1991 = vstv %s1990
        %v1992 = vrsqrt.pop %v1991
        %v1993 = vmul.f32 %v1992, %v1991
        %v1994 = vmul.f32 %v1993, %v1992
        %v1995 = vmul.f32 0.5, %v1994
        %v1996 = vsub.f32 1.5, %v1995
        %v1997 = vmul.f32 %v1992, %v1996
        %vm1998 = vweird.f32 %v1991
        %vm1999 = vweird.f32 %v1992
        %vm2000 = vmor %vm1998, %vm1999
        %v2001 = vsel %vm2000, %v1992, %v1997
        %s2002 = vtos %v2001
        %v2003 = vstv %s2002
        %v2004 = vmul.f32 %v1969, %v2003
        %v2005 = vmul.f32 %v2004, %v1947
        %v2006 = vadd.f32 %v2005, %v1948
        %2007 = vst.msk [vmem:[%s900] sm:$0xff] %vm911, %v2006
        %s2008 = sand.u32 %s527, 1
        %s2009 = scalar_lea.sflag [#allocation4], %s2008
        %s2010 = sand.u32 %s527, 1
        %s2011 = smul.addr %s2010, 8
        %s2012 = scalar_lea.vmem [#allocation23], %s2011
        // Predicated region
        $region161: #{tpu_custom_call.1} parent=107 // pred_check
          %p2013 = pneg %p537
        $region162: #{tpu_custom_call.1} parent=107 // pred_check_branch
          %2015 = sbr.rel (%p2013) target = $region164
        $region163: #{tpu_custom_call.1} parent=107 // pred_region
          %2017 = vsyncadd %s2009, 0
          %s2018 = smul.addr %s47, 8
          %s2019 = scalar_lea.hbm %s22, %s2018
          %s2021 = sshll.u32 %s2012, 4
          %s2022 = int_to_ptr.vmem [resolvable:$true] %s2021
          %s2023 = sshll.u32 %s2019, 4
          %s2024 = int_to_ptr.hbm [resolvable:$true] %s2023
          %2026 = dma.vmem_to_hbm [thread:$0]  %s2022, 128, %s2024, %s2009
        $region164: #{tpu_custom_call.1} parent=107 // pred_fallthru
          _
      $region108: #{tpu_custom_call.1} parent=5 // pred_fallthru
        _
      %p2027 = scmp.le.s32.totalorder 2, %s42
      // Predicated region
      $region165: #{tpu_custom_call.1} parent=5 // pred_check
        %p2028 = pneg %p2027
      $region166: #{tpu_custom_call.1} parent=5 // pred_check_branch
        %2030 = sbr.rel (%p2028) target = $region168
      $region167: #{tpu_custom_call.1} parent=5 // pred_region
        %s2031 = ssub.s32 %s42, 2
        // Predicated region
        $region169: #{tpu_custom_call.1} parent=167 // pred_check
          %p2032 = pneg %p543
        $region170: #{tpu_custom_call.1} parent=167 // pred_check_branch
          %2034 = sbr.rel (%p2032) target = $region172
        $region171: #{tpu_custom_call.1} parent=167 // pred_region
          %s2035 = sand.u32 %s528, 1
          %s2036 = scalar_lea.sflag [#allocation4], %s2035
          %s2037 = sand.u32 %s528, 1
          %s2038 = smul.addr %s2037, 8
          %s2039 = scalar_lea.vmem [#allocation23], %s2038
          %2041 = dma.done %s2036, 128
        $region172: #{tpu_custom_call.1} parent=167 // pred_fallthru
          _
      $region168: #{tpu_custom_call.1} parent=5 // pred_fallthru
        _
    $region6: #{tpu_custom_call.1} parent=1 // loop_footer
      %s46 = sadd.s32 1, %s42
    $region7: #{tpu_custom_call.1} parent=1 // loop_footer_branch
      %41 = sbr.rel target = $region3
    $region8: #{tpu_custom_call.1} parent=1 // loop_exit
      _
    %2042 = vsyncpa [#allocation3], 1
    %s2043 = scalar_lea.sflag [#allocation3], 1
    %2044 = vsyncpa %s2043, 1
    %2045 = vsyncpa [#allocation6], 1
    %s2046 = scalar_lea.sflag [#allocation6], 1
    %2047 = vsyncpa %s2046, 1
    %2048 = vsyncpa [#allocation9], 1
    %2049 = vsyncpa [#allocation12], 1
    %2050 = vsyncpa [#allocation15], 1
    %2051 = vsyncpa [#allocation18], 1
    %2052 = vsyncpa [#allocation21], 1
    %2053 = vsyncpa [#allocation4], 1
    %s2054 = scalar_lea.sflag [#allocation4], 1
    %2055 = vsyncpa %s2054, 1

</llo_original>
